<compile_context>
chip_gen: v5e
topology: v5e:2x2
jax: 0.10.0
libtpu: 0.0.40
codegen_flags: <defaults>
</compile_context>

<pallas_src>
import functools

import jax
import jax.numpy as jnp
from jax.experimental import pallas as pl
from jax.experimental.pallas import tpu as pltpu


def _layer_norm(x, gamma, beta, eps=1e-5):
    # Single-pass biased variance (E[x^2] - mean^2): one cross-lane reduction pass
    # fewer than mean-then-mean((x-mean)^2) and no full-size (x - mean) temporary.
    mean = jnp.mean(x, axis=-1, keepdims=True)
    mean_sq = jnp.mean(x * x, axis=-1, keepdims=True)
    var = mean_sq - mean * mean
    return (x - mean) * jax.lax.rsqrt(var + eps) * gamma + beta


def _attend_and_ffn(heads, B, Sq, Skv, Q, K, V, x_res,
                    wo, bo, g1, be1, w1, b1, w2, b2, g2, be2):
    """Everything after the Q/K/V projections. Q: (B*Sq, E); K, V: (B*Skv, E); f32."""
    E = x_res.shape[-1]
    D = E // heads
    bf16 = jnp.bfloat16

    def split_heads(x, S):   # (B*S, H*D) -> (B*H, S, D), head-major E split (torch order)
        x = x.reshape(B, S, heads, D)
        x = jnp.transpose(x, (0, 2, 1, 3))
        return x.reshape(B * heads, S, D)

    # TODO(synk): at production D (= E/heads >= 128) replace these relayouts with a
    # head-batched matmul path; the transposes cost XLU passes at scale.
    Qh = split_heads(Q, Sq).astype(bf16)
    Kh = split_heads(K, Skv).astype(bf16)
    Vh = split_heads(V, Skv).astype(bf16)

    # Batched attention over (B*heads).  The 1/sqrt(E) scale is folded into Wq.
    # TODO(synk): flash-style tiling over the KV length (running max/sum) for S >= 2k
    # so the (B*H, Sq, Skv) score tile stays bounded in VMEM.
    s = jnp.einsum('bqd,bkd->bqk', Qh, Kh, preferred_element_type=jnp.float32)
    p = jnp.exp(s - jnp.max(s, axis=-1, keepdims=True))
    denom = jnp.sum(p, axis=-1, keepdims=True)               # (B*H, Sq, 1)
    ctx = jnp.einsum('bqk,bkd->bqd', p.astype(bf16), Vh,
                     preferred_element_type=jnp.float32)
    # Deferred softmax normalization: divide the (B*H, Sq, D) context instead of the
    # (B*H, Sq, Skv) probabilities (S*D VPU work instead of S*S, one less S^2 temp).
    ctx = ctx * pl.reciprocal(denom, approx=True)

    # (B*H, Sq, D) -> (B*Sq, E): heads concatenated head-major along E (torch reshape).
    attn = jnp.transpose(ctx.reshape(B, heads, Sq, D), (0, 2, 1, 3)).reshape(B * Sq, E)

    # fc_out
    attn = jnp.dot(attn.astype(bf16), wo, preferred_element_type=jnp.float32) + bo

    # dropout(LayerNorm(attention + query)) -- dropout == identity (eval mode)
    x = _layer_norm(attn + x_res, g1, be1)

    # feed_forward: Linear -> ReLU -> Linear
    # TODO(synk): tile over F (512-1024-lane chunks, h1 tile-resident) at production
    # F = 4E so the f32 h1 activation does not dominate VMEM (v7x has 64 MiB/TC).
    h1 = jnp.dot(x.astype(bf16), w1, preferred_element_type=jnp.float32) + b1
    h1 = jnp.maximum(h1, 0.0)
    ff = jnp.dot(h1.astype(bf16), w2, preferred_element_type=jnp.float32) + b2

    # dropout(LayerNorm(forward + x))
    return _layer_norm(ff + x, g2, be2).reshape(B, Sq, E)


def _cross_attn_kernel(heads,
                       v_ref, k_ref, q_ref,
                       wv_ref, wk_ref, wq_ref,
                       wo_ref, bo_ref, g1_ref, be1_ref,
                       w1_ref, b1_ref, w2_ref, b2_ref, g2_ref, be2_ref,
                       out_ref):
    B, Sq, E = q_ref.shape
    Skv = k_ref.shape[1]
    bf16 = jnp.bfloat16

    # value/key arrive pre-cast to bf16 (half the activation DMA); query stays f32.
    v = v_ref[...].reshape(B * Skv, E)
    k = k_ref[...].reshape(B * Skv, E)
    q = q_ref[...].reshape(B * Sq, E)

    V = jnp.dot(v, wv_ref[...], preferred_element_type=jnp.float32)
    K = jnp.dot(k, wk_ref[...], preferred_element_type=jnp.float32)
    Q = jnp.dot(q.astype(bf16), wq_ref[...], preferred_element_type=jnp.float32)

    out_ref[...] = _attend_and_ffn(
        heads, B, Sq, Skv, Q, K, V, q,
        wo_ref[...], bo_ref[...], g1_ref[...], be1_ref[...],
        w1_ref[...], b1_ref[...], w2_ref[...], b2_ref[...],
        g2_ref[...], be2_ref[...])


def _self_attn_kernel(heads,
                      x_ref, wqkv_ref,
                      wo_ref, bo_ref, g1_ref, be1_ref,
                      w1_ref, b1_ref, w2_ref, b2_ref, g2_ref, be2_ref,
                      out_ref):
    B, S, E = x_ref.shape
    bf16 = jnp.bfloat16

    x = x_ref[...].reshape(B * S, E)
    # Fused QKV: one weight-stationary MXU pass over [Wv | Wk | Wq] instead of three.
    qkv = jnp.dot(x.astype(bf16), wqkv_ref[...], preferred_element_type=jnp.float32)
    V = qkv[:, 0 * E:1 * E]
    K = qkv[:, 1 * E:2 * E]
    Q = qkv[:, 2 * E:3 * E]

    out_ref[...] = _attend_and_ffn(
        heads, B, S, S, Q, K, V, x,
        wo_ref[...], bo_ref[...], g1_ref[...], be1_ref[...],
        w1_ref[...], b1_ref[...], w2_ref[...], b2_ref[...],
        g2_ref[...], be2_ref[...])


def _num_tensorcores_per_chip():
    # v7x has 2 TensorCores per chip (grid axes marked "parallel" shard across them);
    # on single-TC v5e/v6e extra grid steps are just serial pipeline overhead, so 1.
    try:
        kind = jax.devices()[0].device_kind.lower()
    except Exception:
        return 1
    return 2 if ("v7" in kind or "7x" in kind) else 1


def _vmem_limit_bytes():
    # Explicit scoped-VMEM budget (defaults are only 16/32 MiB): 3/4 of physical
    # capacity (128 MiB on v5e/v6e, 64 MiB/TC on v7x), capped at 96 MiB.
    try:
        cap = int(getattr(pltpu.get_tpu_info(), "vmem_capacity_bytes", 0)) or (128 << 20)
        return int(min(cap * 3 // 4, 96 << 20))
    except Exception:
        return 32 << 20


def transformer_block(value, key, query, kp, heads, *, batch_tiles=None, q_tile=None):
    """TransformerBlock forward (inference: dropout identity, mask=None).

    kp holds kernel-ready params: bf16 transposed / block-diagonal weights, (1, dim)
    f32 biases and LayerNorm params.  The block-diagonal / fused-QKV fold assumes the
    per-head (D, D) Linear is shared across heads (true for this torch module).
    """
    N, Sq, E = query.shape
    Skv = key.shape[1]
    F = kp["w1"].shape[1]
    D = E // heads
    assert value.shape == key.shape and value.shape[0] == N and value.shape[2] == E

    if batch_tiles is None:
        batch_tiles = min(N, _num_tensorcores_per_chip())
    if N % batch_tiles:
        batch_tiles = 1
    B = N // batch_tiles

    # Query-row tiling: keeps per-step VMEM bounded and gives the second TensorCore
    # (v7x) work even at N == 1.  K/V stay full-length per step.  At production sizes
    # pick a q_tile that is a multiple of 128 (256 on v6e/v7x).
    if q_tile is None:
        q_tile = Sq
        for cand in (256, 128):
            if Sq > cand and Sq % cand == 0:
                q_tile = cand
                break
    assert Sq % q_tile == 0
    q_tiles = Sq // q_tile

    # Self-attention fast path only when the whole query length is one tile, since the
    # fused projection also produces K/V (which need the full sequence).
    fused = (value is query) and (key is query) and (Sq == Skv) and (q_tiles == 1)

    q_spec = pl.BlockSpec((B, q_tile, E), lambda n, qi: (n, qi, 0))
    kv_spec = pl.BlockSpec((B, Skv, E), lambda n, qi: (n, 0, 0))

    def full(shape):
        r = len(shape)
        return pl.BlockSpec(shape, lambda n, qi, _r=r: (0,) * _r)

    # TODO(synk): on v7x (64 MiB VMEM/TC) single-buffer these constant weight blocks
    # (pipeline_mode=pl.Buffered(1)) or stage them once via pl.ANY + make_async_copy;
    # at toy shapes the default double-buffering is negligible.
    weight_specs = [
        full((E, E)), full((1, E)),      # wo, bo
        full((1, E)), full((1, E)),      # g1, be1
        full((E, F)), full((1, F)),      # w1, b1
        full((F, E)), full((1, E)),      # w2, b2
        full((1, E)), full((1, E)),      # g2, be2
    ]
    weight_args = (kp["wo_t"], kp["bo"], kp["g1"], kp["be1"],
                   kp["w1"], kp["b1"], kp["w2"], kp["b2"], kp["g2"], kp["be2"])

    if fused:
        kernel = functools.partial(_self_attn_kernel, heads)
        in_specs = [q_spec, full((E, 3 * E))] + weight_specs
        args = (query, kp["wqkv_bd"]) + weight_args
        proj_flops = 2 * Sq * E * (3 * E)
    else:
        kernel = functools.partial(_cross_attn_kernel, heads)
        in_specs = [kv_spec, kv_spec, q_spec,
                    full((E, E)), full((E, E)), full((E, E))] + weight_specs
        # bf16 value/key halve their HBM->VMEM DMA; query stays f32 for the residual.
        args = (value.astype(jnp.bfloat16), key.astype(jnp.bfloat16), query,
                kp["wv_bd"], kp["wk_bd"], kp["wq_bd"]) + weight_args
        proj_flops = 2 * E * E * (2 * Skv + Sq)

    # Advisory cost estimate so XLA schedules the custom call sensibly.
    flops = int(N * (proj_flops
                     + 2 * 2 * heads * Sq * Skv * D   # scores + context matmuls
                     + 2 * Sq * E * E                 # fc_out
                     + 2 * 2 * Sq * E * F))           # FFN
    cost = pl.CostEstimate(
        flops=flops,
        transcendentals=int(N * heads * Sq * Skv),
        bytes_accessed=int(4 * 2 * N * Sq * E + 2 * 2 * N * Skv * E
                           + 2 * (4 * E * E + E * F + F * E) + 4 * (6 * E + F)))

    return pl.pallas_call(
        kernel,
        out_shape=jax.ShapeDtypeStruct((N, Sq, E), jnp.float32),
        grid_spec=pltpu.PrefetchScalarGridSpec(
            num_scalar_prefetch=0,
            grid=(batch_tiles, q_tiles),
            in_specs=in_specs,
            out_specs=q_spec,
        ),
        compiler_params=pltpu.CompilerParams(
            dimension_semantics=("parallel", "parallel"),
            vmem_limit_bytes=_vmem_limit_bytes()),
        cost_estimate=cost,
    )(*args)


def init_params(key, E, heads, forward_expansion):
    """Deterministic synthetic parameters, PyTorch shapes (out_features, in_features)."""
    D = E // heads
    F = forward_expansion * E
    ks = jax.random.split(key, 13)

    def nrm(k, shape, s=0.05):
        return jax.random.normal(k, shape, jnp.float32) * s

    p = {
        "Wv": nrm(ks[0], (D, D)), "Wk": nrm(ks[1], (D, D)), "Wq": nrm(ks[2], (D, D)),
        "Wo": nrm(ks[3], (E, E)), "bo": nrm(ks[4], (E,)),
        "W1": nrm(ks[5], (F, E)), "b1": nrm(ks[6], (F,)),
        "W2": nrm(ks[7], (E, F)), "b2": nrm(ks[8], (E,)),
        "g1": 1.0 + nrm(ks[9], (E,)), "be1": nrm(ks[10], (E,)),
        "g2": 1.0 + nrm(ks[11], (E,)), "be2": nrm(ks[12], (E,)),
    }

    eye_h = jnp.eye(heads, dtype=jnp.float32)
    scale = 1.0 / (float(E) ** 0.5)   # torch: scores / embeddings_size ** 0.5 (not sqrt(D))
    # Per-head (D, D) Linear (shared across heads, bias-free) folded into one (E, E)
    # block-diagonal matmul -- the lane-dense form for D < 128.
    # TODO(synk): for D >= 128 skip the kron (H x FLOPs / weight bytes) and use a
    # head-batched matmul with the raw (D, D) weight instead.
    wv_bd = jnp.kron(eye_h, p["Wv"].T)
    wk_bd = jnp.kron(eye_h, p["Wk"].T)
    wq_bd = jnp.kron(eye_h, p["Wq"].T) * scale   # fold attention scale in f32
    bf16 = jnp.bfloat16
    kp = {
        "wv_bd": wv_bd.astype(bf16), "wk_bd": wk_bd.astype(bf16),
        "wq_bd": wq_bd.astype(bf16),
        # Fused [Wv | Wk | Wq] for the self-attention fast path (one (E, 3E) matmul).
        "wqkv_bd": jnp.concatenate([wv_bd, wk_bd, wq_bd], axis=1).astype(bf16),
        "wo_t": p["Wo"].T.astype(bf16), "bo": p["bo"].reshape(1, E),
        "g1": p["g1"].reshape(1, E), "be1": p["be1"].reshape(1, E),
        "w1": p["W1"].T.astype(bf16), "b1": p["b1"].reshape(1, F),
        "w2": p["W2"].T.astype(bf16), "b2": p["b2"].reshape(1, E),
        "g2": p["g2"].reshape(1, E), "be2": p["be2"].reshape(1, E),
    }
    return p, kp


def reference(value, key, query, p, heads):
    """Pure-JAX f32 mirror of the PyTorch forward (mask=None, dropout=eval)."""
    N, S, E = query.shape
    D = E // heads
    v = value.reshape(N, -1, heads, D)
    k = key.reshape(N, -1, heads, D)
    q = query.reshape(N, S, heads, D)
    V = jnp.einsum("nlhd,od->nlho", v, p["Wv"])
    K = jnp.einsum("nlhd,od->nlho", k, p["Wk"])
    Q = jnp.einsum("nlhd,od->nlho", q, p["Wq"])
    scores = jnp.einsum("nqhd,nkhd->nhqk", Q, K) / (E ** 0.5)
    attn = jax.nn.softmax(scores, axis=3)
    out = jnp.einsum("nhql,nlhd->nqhd", attn, V).reshape(N, S, E)
    out = out @ p["Wo"].T + p["bo"]
    x = _layer_norm(out + query, p["g1"], p["be1"])
    ff = jnp.maximum(x @ p["W1"].T + p["b1"], 0.0) @ p["W2"].T + p["b2"]
    return _layer_norm(ff + x, p["g2"], p["be2"])


if __name__ == "__main__":
    N, S, E = 2, 8, 32
    heads, forward_expansion = 4, 4

    root = jax.random.PRNGKey(0)
    k_v, k_k, k_q, k_p = jax.random.split(root, 4)
    value = jax.random.normal(k_v, (N, S, E), jnp.float32)
    key = jax.random.normal(k_k, (N, S, E), jnp.float32)
    query = jax.random.normal(k_q, (N, S, E), jnp.float32)

    params, kparams = init_params(k_p, E, heads, forward_expansion)

    # Cross-attention path (distinct value/key/query).
    out = jax.block_until_ready(transformer_block(value, key, query, kparams, heads))
    ref = reference(value, key, query, params, heads)
    assert out.shape == (N, S, E)
    # bf16 matmul operands + approx reciprocal vs a pure-f32 reference -> relaxed tol.
    assert jnp.allclose(out, ref, atol=2e-2, rtol=2e-2), (
        f"max abs err = {jnp.max(jnp.abs(out - ref))}")

    # Self-attention fast path (fused QKV projection).
    out_s = jax.block_until_ready(transformer_block(query, query, query, kparams, heads))
    ref_s = reference(query, query, query, params, heads)
    assert jnp.allclose(out_s, ref_s, atol=2e-2, rtol=2e-2), (
        f"max abs err (self-attn) = {jnp.max(jnp.abs(out_s - ref_s))}")

    print("KERNEL_OK")
</pallas_src>

<mosaic_0001>
module attributes {stable_mosaic.version = 11 : i64} {
  func.func @_cross_attn_kernel(%arg0: i32, %arg1: i32, %arg2: memref<2x8x32xbf16, #tpu.memory_space<vmem>>, %arg3: memref<2x8x32xbf16, #tpu.memory_space<vmem>>, %arg4: memref<2x8x32xf32, #tpu.memory_space<vmem>>, %arg5: memref<32x32xbf16, #tpu.memory_space<vmem>>, %arg6: memref<32x32xbf16, #tpu.memory_space<vmem>>, %arg7: memref<32x32xbf16, #tpu.memory_space<vmem>>, %arg8: memref<32x32xbf16, #tpu.memory_space<vmem>>, %arg9: memref<1x32xf32, #tpu.memory_space<vmem>>, %arg10: memref<1x32xf32, #tpu.memory_space<vmem>>, %arg11: memref<1x32xf32, #tpu.memory_space<vmem>>, %arg12: memref<32x128xbf16, #tpu.memory_space<vmem>>, %arg13: memref<1x128xf32, #tpu.memory_space<vmem>>, %arg14: memref<128x32xbf16, #tpu.memory_space<vmem>>, %arg15: memref<1x32xf32, #tpu.memory_space<vmem>>, %arg16: memref<1x32xf32, #tpu.memory_space<vmem>>, %arg17: memref<1x32xf32, #tpu.memory_space<vmem>>, %arg18: memref<2x8x32xf32, #tpu.memory_space<vmem>>) attributes {dimension_semantics = [#tpu.dimension_semantics<parallel>, #tpu.dimension_semantics<parallel>], iteration_bounds = array<i64: 1, 1>, scalar_prefetch = 0 : i64, scratch_operands = 0 : i64, tpu.core_type = #tpu.core_type<tc>, window_params = [{transform_indices = @transform_0, window_bounds = array<i64: 2, 8, 32>}, {transform_indices = @transform_1, window_bounds = array<i64: 2, 8, 32>}, {transform_indices = @transform_2, window_bounds = array<i64: 2, 8, 32>}, {pipeline_mode = #tpu.pipeline_mode<synchronous>, transform_indices = @transform_3, window_bounds = array<i64: 32, 32>}, {pipeline_mode = #tpu.pipeline_mode<synchronous>, transform_indices = @transform_4, window_bounds = array<i64: 32, 32>}, {pipeline_mode = #tpu.pipeline_mode<synchronous>, transform_indices = @transform_5, window_bounds = array<i64: 32, 32>}, {pipeline_mode = #tpu.pipeline_mode<synchronous>, transform_indices = @transform_6, window_bounds = array<i64: 32, 32>}, {pipeline_mode = #tpu.pipeline_mode<synchronous>, transform_indices = @transform_7, window_bounds = array<i64: 1, 32>}, {pipeline_mode = #tpu.pipeline_mode<synchronous>, transform_indices = @transform_8, window_bounds = array<i64: 1, 32>}, {pipeline_mode = #tpu.pipeline_mode<synchronous>, transform_indices = @transform_9, window_bounds = array<i64: 1, 32>}, {pipeline_mode = #tpu.pipeline_mode<synchronous>, transform_indices = @transform_10, window_bounds = array<i64: 32, 128>}, {pipeline_mode = #tpu.pipeline_mode<synchronous>, transform_indices = @transform_11, window_bounds = array<i64: 1, 128>}, {pipeline_mode = #tpu.pipeline_mode<synchronous>, transform_indices = @transform_12, window_bounds = array<i64: 128, 32>}, {pipeline_mode = #tpu.pipeline_mode<synchronous>, transform_indices = @transform_13, window_bounds = array<i64: 1, 32>}, {pipeline_mode = #tpu.pipeline_mode<synchronous>, transform_indices = @transform_14, window_bounds = array<i64: 1, 32>}, {pipeline_mode = #tpu.pipeline_mode<synchronous>, transform_indices = @transform_15, window_bounds = array<i64: 1, 32>}, {transform_indices = @transform_16, window_bounds = array<i64: 2, 8, 32>}]} {
    %c0 = arith.constant 0 : index
    %c0_0 = arith.constant 0 : index
    %c0_1 = arith.constant 0 : index
    %0 = vector.load %arg2[%c0, %c0_0, %c0_1] : memref<2x8x32xbf16, #tpu.memory_space<vmem>>, vector<2x8x32xbf16>
    %1 = vector.shape_cast %0 : vector<2x8x32xbf16> to vector<16x32xbf16>
    %c0_2 = arith.constant 0 : index
    %c0_3 = arith.constant 0 : index
    %c0_4 = arith.constant 0 : index
    %2 = vector.load %arg3[%c0_2, %c0_3, %c0_4] : memref<2x8x32xbf16, #tpu.memory_space<vmem>>, vector<2x8x32xbf16>
    %3 = vector.shape_cast %2 : vector<2x8x32xbf16> to vector<16x32xbf16>
    %c0_5 = arith.constant 0 : index
    %c0_6 = arith.constant 0 : index
    %c0_7 = arith.constant 0 : index
    %4 = vector.load %arg4[%c0_5, %c0_6, %c0_7] : memref<2x8x32xf32, #tpu.memory_space<vmem>>, vector<2x8x32xf32>
    %5 = vector.shape_cast %4 : vector<2x8x32xf32> to vector<16x32xf32>
    %c0_8 = arith.constant 0 : index
    %c0_9 = arith.constant 0 : index
    %6 = vector.load %arg5[%c0_8, %c0_9] : memref<32x32xbf16, #tpu.memory_space<vmem>>, vector<32x32xbf16>
    %cst = arith.constant dense<0.000000e+00> : vector<16x32xf32>
    %7 = tpu.matmul %1, %6, %cst {dimension_numbers = #tpu.dot_dimension_numbers<[1], [0], [0], [1], [0, 0, 1, 1], [], []>} : vector<16x32xbf16>, vector<32x32xbf16>, vector<16x32xf32> -> vector<16x32xf32>
    %c0_10 = arith.constant 0 : index
    %c0_11 = arith.constant 0 : index
    %8 = vector.load %arg6[%c0_10, %c0_11] : memref<32x32xbf16, #tpu.memory_space<vmem>>, vector<32x32xbf16>
    %cst_12 = arith.constant dense<0.000000e+00> : vector<16x32xf32>
    %9 = tpu.matmul %3, %8, %cst_12 {dimension_numbers = #tpu.dot_dimension_numbers<[1], [0], [0], [1], [0, 0, 1, 1], [], []>} : vector<16x32xbf16>, vector<32x32xbf16>, vector<16x32xf32> -> vector<16x32xf32>
    %10 = arith.truncf %5 : vector<16x32xf32> to vector<16x32xbf16>
    %c0_13 = arith.constant 0 : index
    %c0_14 = arith.constant 0 : index
    %11 = vector.load %arg7[%c0_13, %c0_14] : memref<32x32xbf16, #tpu.memory_space<vmem>>, vector<32x32xbf16>
    %cst_15 = arith.constant dense<0.000000e+00> : vector<16x32xf32>
    %12 = tpu.matmul %10, %11, %cst_15 {dimension_numbers = #tpu.dot_dimension_numbers<[1], [0], [0], [1], [0, 0, 1, 1], [], []>} : vector<16x32xbf16>, vector<32x32xbf16>, vector<16x32xf32> -> vector<16x32xf32>
    %c0_16 = arith.constant 0 : index
    %c0_17 = arith.constant 0 : index
    %13 = vector.load %arg8[%c0_16, %c0_17] : memref<32x32xbf16, #tpu.memory_space<vmem>>, vector<32x32xbf16>
    %c0_18 = arith.constant 0 : index
    %c0_19 = arith.constant 0 : index
    %14 = vector.load %arg9[%c0_18, %c0_19] : memref<1x32xf32, #tpu.memory_space<vmem>>, vector<1x32xf32>
    %c0_20 = arith.constant 0 : index
    %c0_21 = arith.constant 0 : index
    %15 = vector.load %arg10[%c0_20, %c0_21] : memref<1x32xf32, #tpu.memory_space<vmem>>, vector<1x32xf32>
    %c0_22 = arith.constant 0 : index
    %c0_23 = arith.constant 0 : index
    %16 = vector.load %arg11[%c0_22, %c0_23] : memref<1x32xf32, #tpu.memory_space<vmem>>, vector<1x32xf32>
    %c0_24 = arith.constant 0 : index
    %c0_25 = arith.constant 0 : index
    %17 = vector.load %arg12[%c0_24, %c0_25] : memref<32x128xbf16, #tpu.memory_space<vmem>>, vector<32x128xbf16>
    %c0_26 = arith.constant 0 : index
    %c0_27 = arith.constant 0 : index
    %18 = vector.load %arg13[%c0_26, %c0_27] : memref<1x128xf32, #tpu.memory_space<vmem>>, vector<1x128xf32>
    %c0_28 = arith.constant 0 : index
    %c0_29 = arith.constant 0 : index
    %19 = vector.load %arg14[%c0_28, %c0_29] : memref<128x32xbf16, #tpu.memory_space<vmem>>, vector<128x32xbf16>
    %c0_30 = arith.constant 0 : index
    %c0_31 = arith.constant 0 : index
    %20 = vector.load %arg15[%c0_30, %c0_31] : memref<1x32xf32, #tpu.memory_space<vmem>>, vector<1x32xf32>
    %c0_32 = arith.constant 0 : index
    %c0_33 = arith.constant 0 : index
    %21 = vector.load %arg16[%c0_32, %c0_33] : memref<1x32xf32, #tpu.memory_space<vmem>>, vector<1x32xf32>
    %c0_34 = arith.constant 0 : index
    %c0_35 = arith.constant 0 : index
    %22 = vector.load %arg17[%c0_34, %c0_35] : memref<1x32xf32, #tpu.memory_space<vmem>>, vector<1x32xf32>
    %23 = vector.shape_cast %12 : vector<16x32xf32> to vector<2x8x4x8xf32>
    %24 = tpu.transpose %23, [0, 2, 1, 3] : vector<2x8x4x8xf32> -> vector<2x4x8x8xf32>
    %25 = vector.shape_cast %24 : vector<2x4x8x8xf32> to vector<8x8x8xf32>
    %26 = arith.truncf %25 : vector<8x8x8xf32> to vector<8x8x8xbf16>
    %27 = vector.shape_cast %9 : vector<16x32xf32> to vector<2x8x4x8xf32>
    %28 = tpu.transpose %27, [0, 2, 1, 3] : vector<2x8x4x8xf32> -> vector<2x4x8x8xf32>
    %29 = vector.shape_cast %28 : vector<2x4x8x8xf32> to vector<8x8x8xf32>
    %30 = arith.truncf %29 : vector<8x8x8xf32> to vector<8x8x8xbf16>
    %31 = vector.shape_cast %7 : vector<16x32xf32> to vector<2x8x4x8xf32>
    %32 = tpu.transpose %31, [0, 2, 1, 3] : vector<2x8x4x8xf32> -> vector<2x4x8x8xf32>
    %33 = vector.shape_cast %32 : vector<2x4x8x8xf32> to vector<8x8x8xf32>
    %34 = arith.truncf %33 : vector<8x8x8xf32> to vector<8x8x8xbf16>
    "tpu.trace_start"() <{level = 10 : i32, message = "bqd,bkd->bqk"}> : () -> ()
    %cst_36 = arith.constant dense<0.000000e+00> : vector<8x8x8xf32>
    %35 = tpu.matmul %26, %30, %cst_36 {dimension_numbers = #tpu.dot_dimension_numbers<[2], [2], [1], [1], [0, 0, 0, 1, 1, 1], [0], [0]>} : vector<8x8x8xbf16>, vector<8x8x8xbf16>, vector<8x8x8xf32> -> vector<8x8x8xf32>
    "tpu.trace_stop"() : () -> ()
    %cst_37 = arith.constant dense<0xFF800000> : vector<8x8xf32>
    %36 = vector.multi_reduction <maximumf>, %35, %cst_37 [2] : vector<8x8x8xf32> to vector<8x8xf32>
    %37 = vector.shape_cast %36 : vector<8x8xf32> to vector<8x8x1xf32>
    %38 = vector.broadcast %37 : vector<8x8x1xf32> to vector<8x8x8xf32>
    %39 = arith.subf %35, %38 : vector<8x8x8xf32>
    %40 = math.exp %39 : vector<8x8x8xf32>
    %cst_38 = arith.constant dense<0.000000e+00> : vector<8x8xf32>
    %41 = vector.multi_reduction <add>, %40, %cst_38 [2] : vector<8x8x8xf32> to vector<8x8xf32>
    %42 = vector.shape_cast %41 : vector<8x8xf32> to vector<8x8x1xf32>
    %43 = arith.truncf %40 : vector<8x8x8xf32> to vector<8x8x8xbf16>
    "tpu.trace_start"() <{level = 10 : i32, message = "bqk,bkd->bqd"}> : () -> ()
    %cst_39 = arith.constant dense<0.000000e+00> : vector<8x8x8xf32>
    %44 = tpu.matmul %43, %34, %cst_39 {dimension_numbers = #tpu.dot_dimension_numbers<[2], [1], [1], [2], [0, 0, 0, 1, 1, 2], [0], [0]>} : vector<8x8x8xbf16>, vector<8x8x8xbf16>, vector<8x8x8xf32> -> vector<8x8x8xf32>
    "tpu.trace_stop"() : () -> ()
    %45 = tpu.reciprocal %42 {approx = true} : vector<8x8x1xf32> -> vector<8x8x1xf32>
    %46 = vector.broadcast %45 : vector<8x8x1xf32> to vector<8x8x8xf32>
    %47 = arith.mulf %44, %46 : vector<8x8x8xf32>
    %48 = vector.shape_cast %47 : vector<8x8x8xf32> to vector<2x4x8x8xf32>
    %49 = tpu.transpose %48, [0, 2, 1, 3] : vector<2x4x8x8xf32> -> vector<2x8x4x8xf32>
    %50 = vector.shape_cast %49 : vector<2x8x4x8xf32> to vector<16x32xf32>
    %51 = arith.truncf %50 : vector<16x32xf32> to vector<16x32xbf16>
    %cst_40 = arith.constant dense<0.000000e+00> : vector<16x32xf32>
    %52 = tpu.matmul %51, %13, %cst_40 {dimension_numbers = #tpu.dot_dimension_numbers<[1], [0], [0], [1], [0, 0, 1, 1], [], []>} : vector<16x32xbf16>, vector<32x32xbf16>, vector<16x32xf32> -> vector<16x32xf32>
    %53 = vector.broadcast %14 : vector<1x32xf32> to vector<16x32xf32>
    %54 = arith.addf %52, %53 : vector<16x32xf32>
    %55 = arith.addf %54, %5 : vector<16x32xf32>
    %cst_41 = arith.constant dense<0.000000e+00> : vector<16xf32>
    %56 = vector.multi_reduction <add>, %55, %cst_41 [1] : vector<16x32xf32> to vector<16xf32>
    %57 = vector.shape_cast %56 : vector<16xf32> to vector<16x1xf32>
    %cst_42 = arith.constant 3.200000e+01 : f32
    %58 = vector.broadcast %cst_42 : f32 to vector<16x1xf32>
    %59 = arith.divf %57, %58 : vector<16x1xf32>
    %60 = arith.mulf %55, %55 : vector<16x32xf32>
    %cst_43 = arith.constant dense<0.000000e+00> : vector<16xf32>
    %61 = vector.multi_reduction <add>, %60, %cst_43 [1] : vector<16x32xf32> to vector<16xf32>
    %62 = vector.shape_cast %61 : vector<16xf32> to vector<16x1xf32>
    %cst_44 = arith.constant 3.200000e+01 : f32
    %63 = vector.broadcast %cst_44 : f32 to vector<16x1xf32>
    %64 = arith.divf %62, %63 : vector<16x1xf32>
    %65 = arith.mulf %59, %59 : vector<16x1xf32>
    %66 = arith.subf %64, %65 : vector<16x1xf32>
    %67 = vector.broadcast %59 : vector<16x1xf32> to vector<16x32xf32>
    %68 = arith.subf %55, %67 : vector<16x32xf32>
    %cst_45 = arith.constant 9.99999974E-6 : f32
    %69 = vector.broadcast %cst_45 : f32 to vector<16x1xf32>
    %70 = arith.addf %66, %69 : vector<16x1xf32>
    %71 = math.rsqrt %70 : vector<16x1xf32>
    %72 = vector.broadcast %71 : vector<16x1xf32> to vector<16x32xf32>
    %73 = arith.mulf %68, %72 : vector<16x32xf32>
    %74 = vector.broadcast %15 : vector<1x32xf32> to vector<16x32xf32>
    %75 = arith.mulf %73, %74 : vector<16x32xf32>
    %76 = vector.broadcast %16 : vector<1x32xf32> to vector<16x32xf32>
    %77 = arith.addf %75, %76 : vector<16x32xf32>
    %78 = arith.truncf %77 : vector<16x32xf32> to vector<16x32xbf16>
    %cst_46 = arith.constant dense<0.000000e+00> : vector<16x128xf32>
    %79 = tpu.matmul %78, %17, %cst_46 {dimension_numbers = #tpu.dot_dimension_numbers<[1], [0], [0], [1], [0, 0, 1, 1], [], []>} : vector<16x32xbf16>, vector<32x128xbf16>, vector<16x128xf32> -> vector<16x128xf32>
    %80 = vector.broadcast %18 : vector<1x128xf32> to vector<16x128xf32>
    %81 = arith.addf %79, %80 : vector<16x128xf32>
    %cst_47 = arith.constant 0.000000e+00 : f32
    %82 = vector.broadcast %cst_47 : f32 to vector<16x128xf32>
    %83 = arith.maximumf %81, %82 : vector<16x128xf32>
    %84 = arith.truncf %83 : vector<16x128xf32> to vector<16x128xbf16>
    %cst_48 = arith.constant dense<0.000000e+00> : vector<16x32xf32>
    %85 = tpu.matmul %84, %19, %cst_48 {dimension_numbers = #tpu.dot_dimension_numbers<[1], [0], [0], [1], [0, 0, 1, 1], [], []>} : vector<16x128xbf16>, vector<128x32xbf16>, vector<16x32xf32> -> vector<16x32xf32>
    %86 = vector.broadcast %20 : vector<1x32xf32> to vector<16x32xf32>
    %87 = arith.addf %85, %86 : vector<16x32xf32>
    %88 = arith.addf %87, %77 : vector<16x32xf32>
    %cst_49 = arith.constant dense<0.000000e+00> : vector<16xf32>
    %89 = vector.multi_reduction <add>, %88, %cst_49 [1] : vector<16x32xf32> to vector<16xf32>
    %90 = vector.shape_cast %89 : vector<16xf32> to vector<16x1xf32>
    %cst_50 = arith.constant 3.200000e+01 : f32
    %91 = vector.broadcast %cst_50 : f32 to vector<16x1xf32>
    %92 = arith.divf %90, %91 : vector<16x1xf32>
    %93 = arith.mulf %88, %88 : vector<16x32xf32>
    %cst_51 = arith.constant dense<0.000000e+00> : vector<16xf32>
    %94 = vector.multi_reduction <add>, %93, %cst_51 [1] : vector<16x32xf32> to vector<16xf32>
    %95 = vector.shape_cast %94 : vector<16xf32> to vector<16x1xf32>
    %cst_52 = arith.constant 3.200000e+01 : f32
    %96 = vector.broadcast %cst_52 : f32 to vector<16x1xf32>
    %97 = arith.divf %95, %96 : vector<16x1xf32>
    %98 = arith.mulf %92, %92 : vector<16x1xf32>
    %99 = arith.subf %97, %98 : vector<16x1xf32>
    %100 = vector.broadcast %92 : vector<16x1xf32> to vector<16x32xf32>
    %101 = arith.subf %88, %100 : vector<16x32xf32>
    %cst_53 = arith.constant 9.99999974E-6 : f32
    %102 = vector.broadcast %cst_53 : f32 to vector<16x1xf32>
    %103 = arith.addf %99, %102 : vector<16x1xf32>
    %104 = math.rsqrt %103 : vector<16x1xf32>
    %105 = vector.broadcast %104 : vector<16x1xf32> to vector<16x32xf32>
    %106 = arith.mulf %101, %105 : vector<16x32xf32>
    %107 = vector.broadcast %21 : vector<1x32xf32> to vector<16x32xf32>
    %108 = arith.mulf %106, %107 : vector<16x32xf32>
    %109 = vector.broadcast %22 : vector<1x32xf32> to vector<16x32xf32>
    %110 = arith.addf %108, %109 : vector<16x32xf32>
    %111 = vector.shape_cast %110 : vector<16x32xf32> to vector<2x8x32xf32>
    %c0_54 = arith.constant 0 : index
    %c0_55 = arith.constant 0 : index
    %c0_56 = arith.constant 0 : index
    %112 = vector.load %arg18[%c0_54, %c0_55, %c0_56] : memref<2x8x32xf32, #tpu.memory_space<vmem>>, vector<2x8x32xf32>
    tpu.vector_store %arg18[%c0_54, %c0_55, %c0_56], %111 {strides = array<i32>} : memref<2x8x32xf32, #tpu.memory_space<vmem>>, vector<2x8x32xf32>,
    return
  }
  func.func @transform_0(%arg0: i32, %arg1: i32) -> (i32, i32, i32) {
    %c0_i32 = arith.constant 0 : i32
    %c0_i32_0 = arith.constant 0 : i32
    %c0_i32_1 = arith.constant 0 : i32
    return %arg0, %c0_i32, %c0_i32_0 : i32, i32, i32
  }
  func.func @transform_1(%arg0: i32, %arg1: i32) -> (i32, i32, i32) {
    %c0_i32 = arith.constant 0 : i32
    %c0_i32_0 = arith.constant 0 : i32
    %c0_i32_1 = arith.constant 0 : i32
    return %arg0, %c0_i32, %c0_i32_0 : i32, i32, i32
  }
  func.func @transform_2(%arg0: i32, %arg1: i32) -> (i32, i32, i32) {
    %c0_i32 = arith.constant 0 : i32
    %c0_i32_0 = arith.constant 0 : i32
    return %arg0, %arg1, %c0_i32 : i32, i32, i32
  }
  func.func @transform_3(%arg0: i32, %arg1: i32) -> (i32, i32) {
    %c0_i32 = arith.constant 0 : i32
    %c0_i32_0 = arith.constant 0 : i32
    %c0_i32_1 = arith.constant 0 : i32
    return %c0_i32, %c0_i32_0 : i32, i32
  }
  func.func @transform_4(%arg0: i32, %arg1: i32) -> (i32, i32) {
    %c0_i32 = arith.constant 0 : i32
    %c0_i32_0 = arith.constant 0 : i32
    %c0_i32_1 = arith.constant 0 : i32
    return %c0_i32, %c0_i32_0 : i32, i32
  }
  func.func @transform_5(%arg0: i32, %arg1: i32) -> (i32, i32) {
    %c0_i32 = arith.constant 0 : i32
    %c0_i32_0 = arith.constant 0 : i32
    %c0_i32_1 = arith.constant 0 : i32
    return %c0_i32, %c0_i32_0 : i32, i32
  }
  func.func @transform_6(%arg0: i32, %arg1: i32) -> (i32, i32) {
    %c0_i32 = arith.constant 0 : i32
    %c0_i32_0 = arith.constant 0 : i32
    %c0_i32_1 = arith.constant 0 : i32
    return %c0_i32, %c0_i32_0 : i32, i32
  }
  func.func @transform_7(%arg0: i32, %arg1: i32) -> (i32, i32) {
    %c0_i32 = arith.constant 0 : i32
    %c0_i32_0 = arith.constant 0 : i32
    %c0_i32_1 = arith.constant 0 : i32
    return %c0_i32, %c0_i32_0 : i32, i32
  }
  func.func @transform_8(%arg0: i32, %arg1: i32) -> (i32, i32) {
    %c0_i32 = arith.constant 0 : i32
    %c0_i32_0 = arith.constant 0 : i32
    %c0_i32_1 = arith.constant 0 : i32
    return %c0_i32, %c0_i32_0 : i32, i32
  }
  func.func @transform_9(%arg0: i32, %arg1: i32) -> (i32, i32) {
    %c0_i32 = arith.constant 0 : i32
    %c0_i32_0 = arith.constant 0 : i32
    %c0_i32_1 = arith.constant 0 : i32
    return %c0_i32, %c0_i32_0 : i32, i32
  }
  func.func @transform_10(%arg0: i32, %arg1: i32) -> (i32, i32) {
    %c0_i32 = arith.constant 0 : i32
    %c0_i32_0 = arith.constant 0 : i32
    %c0_i32_1 = arith.constant 0 : i32
    return %c0_i32, %c0_i32_0 : i32, i32
  }
  func.func @transform_11(%arg0: i32, %arg1: i32) -> (i32, i32) {
    %c0_i32 = arith.constant 0 : i32
    %c0_i32_0 = arith.constant 0 : i32
    %c0_i32_1 = arith.constant 0 : i32
    return %c0_i32, %c0_i32_0 : i32, i32
  }
  func.func @transform_12(%arg0: i32, %arg1: i32) -> (i32, i32) {
    %c0_i32 = arith.constant 0 : i32
    %c0_i32_0 = arith.constant 0 : i32
    %c0_i32_1 = arith.constant 0 : i32
    return %c0_i32, %c0_i32_0 : i32, i32
  }
  func.func @transform_13(%arg0: i32, %arg1: i32) -> (i32, i32) {
    %c0_i32 = arith.constant 0 : i32
    %c0_i32_0 = arith.constant 0 : i32
    %c0_i32_1 = arith.constant 0 : i32
    return %c0_i32, %c0_i32_0 : i32, i32
  }
  func.func @transform_14(%arg0: i32, %arg1: i32) -> (i32, i32) {
    %c0_i32 = arith.constant 0 : i32
    %c0_i32_0 = arith.constant 0 : i32
    %c0_i32_1 = arith.constant 0 : i32
    return %c0_i32, %c0_i32_0 : i32, i32
  }
  func.func @transform_15(%arg0: i32, %arg1: i32) -> (i32, i32) {
    %c0_i32 = arith.constant 0 : i32
    %c0_i32_0 = arith.constant 0 : i32
    %c0_i32_1 = arith.constant 0 : i32
    return %c0_i32, %c0_i32_0 : i32, i32
  }
  func.func @transform_16(%arg0: i32, %arg1: i32) -> (i32, i32, i32) {
    %c0_i32 = arith.constant 0 : i32
    %c0_i32_0 = arith.constant 0 : i32
    return %arg0, %arg1, %c0_i32 : i32, i32, i32
  }
}

</mosaic_0001>

<llo_original>
// kernel: tpu_custom_call.1
$region0: #{tpu_custom_call.1}
  #allocation0 [shape = 'u32[]', space=smem, size = 0x4, offset = 0x4, fixed_abs, tag = 'smem constant byte address 0x4 - core index']
  #allocation1 [shape = 'u32[72,128]{1,0:T(1,128)}', space=vmem, size = 0x9000, scoped, tag = 'internal scratch']
  %s0 = inlined_call_operand.hbm [shape: bf16[2,8,32], index: 0, kind: input, shape index: {}]
  %s1 = inlined_call_operand.hbm [shape: bf16[2,8,32], index: 1, kind: input, shape index: {}]
  %s2 = inlined_call_operand.vmem [shape: f32[2,8,32], index: 2, kind: input, shape index: {}]
  %s3 = inlined_call_operand.vmem [shape: bf16[32,32], index: 3, kind: input, shape index: {}]
  %s4 = inlined_call_operand.vmem [shape: bf16[32,32], index: 4, kind: input, shape index: {}]
  %s5 = inlined_call_operand.vmem [shape: bf16[32,32], index: 5, kind: input, shape index: {}]
  %s6 = inlined_call_operand.vmem [shape: bf16[32,32], index: 6, kind: input, shape index: {}]
  %s7 = inlined_call_operand.vmem [shape: f32[1,32], index: 7, kind: input, shape index: {}]
  %s8 = inlined_call_operand.vmem [shape: f32[1,32], index: 8, kind: input, shape index: {}]
  %s9 = inlined_call_operand.vmem [shape: f32[1,32], index: 9, kind: input, shape index: {}]
  %s10 = inlined_call_operand.hbm [shape: bf16[32,128], index: 10, kind: input, shape index: {}]
  %s11 = inlined_call_operand.vmem [shape: f32[1,128], index: 11, kind: input, shape index: {}]
  %s12 = inlined_call_operand.vmem [shape: bf16[128,32], index: 12, kind: input, shape index: {}]
  %s13 = inlined_call_operand.vmem [shape: f32[1,32], index: 13, kind: input, shape index: {}]
  %s14 = inlined_call_operand.vmem [shape: f32[1,32], index: 14, kind: input, shape index: {}]
  %s15 = inlined_call_operand.vmem [shape: f32[1,32], index: 15, kind: input, shape index: {}]
  %s16 = inlined_call_operand.hbm [shape: f32[2,8,32], index: 16, kind: output, shape index: {}]
  %s17 = sld [smem:[#allocation0]]
  $region86: #{tpu_custom_call.1} parent=0
    _
  %s19 = ssub.s32 1, %s17
  %s20 = scalar_select 0, %s19, %s17
  $region1: #{tpu_custom_call.1} parent=0
    #allocation2 [shape = 'u8[4096]{0}', space=vmem, size = 0x1000, scoped, tag = 'input window, operand 0, single buffered']
    #allocation3 [shape = 's32[1]{0}', space=sflag, size = 0x4, scoped, tag = 'scoped memory for tpu_custom_call.1']
    #allocation4 [shape = 's32[1]{0}', space=sflag, size = 0x4, scoped, tag = 'scoped memory for tpu_custom_call.1']
    #allocation5 [shape = 'u8[4096]{0}', space=vmem, size = 0x1000, scoped, tag = 'input window, operand 1, single buffered']
    #allocation6 [shape = 's32[1]{0}', space=sflag, size = 0x4, scoped, tag = 'scoped memory for tpu_custom_call.1']
    #allocation7 [shape = 'u8[8192]{0}', space=vmem, size = 0x2000, scoped, tag = 'input window, operand 10, single buffered']
    #allocation8 [shape = 'u8[8192]{0}', space=vmem, size = 0x2000, scoped, tag = 'output window, operand 0, single buffered']
    %21 = vsyncpa [#allocation3], 0
    %22 = vsyncpa [#allocation6], 0
    %23 = vsyncpa [#allocation4], 0
    // Predicated region
    $region2: #{tpu_custom_call.1} parent=1 // pred_check
      _
    $region3: #{tpu_custom_call.1} parent=1 // pred_check_branch
      %25 = sbr.rel (0) target = $region5
    $region4: #{tpu_custom_call.1} parent=1 // pred_region
      %27 = vsyncadd [#allocation3], 0
      %s28 = sshll.u32 %s0, 4
      %s29 = int_to_ptr.hbm [resolvable:$true] %s28
      %s30 = sshll.u32 [#allocation2], 4
      %s31 = int_to_ptr.vmem [resolvable:$true] %s30
      %36 = dma.hbm_to_vmem [thread:$0]  %s29, 128, %s31, [#allocation3], 64, 64, 4
    $region5: #{tpu_custom_call.1} parent=1 // pred_fallthru
      _
    // Predicated region
    $region6: #{tpu_custom_call.1} parent=1 // pred_check
      _
    $region7: #{tpu_custom_call.1} parent=1 // pred_check_branch
      %38 = sbr.rel (0) target = $region9
    $region8: #{tpu_custom_call.1} parent=1 // pred_region
      %40 = vsyncadd [#allocation6], 0
      %s41 = sshll.u32 %s1, 4
      %s42 = int_to_ptr.hbm [resolvable:$true] %s41
      %s43 = sshll.u32 [#allocation5], 4
      %s44 = int_to_ptr.vmem [resolvable:$true] %s43
      %49 = dma.hbm_to_vmem [thread:$0]  %s42, 128, %s44, [#allocation6], 64, 64, 4
    $region9: #{tpu_custom_call.1} parent=1 // pred_fallthru
      _
    // Predicated region
    $region10: #{tpu_custom_call.1} parent=1 // pred_check
      _
    $region11: #{tpu_custom_call.1} parent=1 // pred_check_branch
      %51 = sbr.rel (0) target = $region13
    $region12: #{tpu_custom_call.1} parent=1 // pred_region
      _
    $region13: #{tpu_custom_call.1} parent=1 // pred_fallthru
      _
    // Predicated region
    $region14: #{tpu_custom_call.1} parent=1 // pred_check
      _
    $region15: #{tpu_custom_call.1} parent=1 // pred_check_branch
      %53 = sbr.rel (0) target = $region17
    $region16: #{tpu_custom_call.1} parent=1 // pred_region
      _
    $region17: #{tpu_custom_call.1} parent=1 // pred_fallthru
      _
    // Predicated region
    $region18: #{tpu_custom_call.1} parent=1 // pred_check
      _
    $region19: #{tpu_custom_call.1} parent=1 // pred_check_branch
      %55 = sbr.rel (0) target = $region21
    $region20: #{tpu_custom_call.1} parent=1 // pred_region
      _
    $region21: #{tpu_custom_call.1} parent=1 // pred_fallthru
      _
    // Predicated region
    $region22: #{tpu_custom_call.1} parent=1 // pred_check
      _
    $region23: #{tpu_custom_call.1} parent=1 // pred_check_branch
      %57 = sbr.rel (0) target = $region25
    $region24: #{tpu_custom_call.1} parent=1 // pred_region
      _
    $region25: #{tpu_custom_call.1} parent=1 // pred_fallthru
      _
    // Predicated region
    $region26: #{tpu_custom_call.1} parent=1 // pred_check
      _
    $region27: #{tpu_custom_call.1} parent=1 // pred_check_branch
      %59 = sbr.rel (0) target = $region29
    $region28: #{tpu_custom_call.1} parent=1 // pred_region
      _
    $region29: #{tpu_custom_call.1} parent=1 // pred_fallthru
      _
    // Predicated region
    $region30: #{tpu_custom_call.1} parent=1 // pred_check
      _
    $region31: #{tpu_custom_call.1} parent=1 // pred_check_branch
      %61 = sbr.rel (0) target = $region33
    $region32: #{tpu_custom_call.1} parent=1 // pred_region
      _
    $region33: #{tpu_custom_call.1} parent=1 // pred_fallthru
      _
    // Predicated region
    $region34: #{tpu_custom_call.1} parent=1 // pred_check
      _
    $region35: #{tpu_custom_call.1} parent=1 // pred_check_branch
      %63 = sbr.rel (0) target = $region37
    $region36: #{tpu_custom_call.1} parent=1 // pred_region
      _
    $region37: #{tpu_custom_call.1} parent=1 // pred_fallthru
      _
    // Predicated region
    $region38: #{tpu_custom_call.1} parent=1 // pred_check
      _
    $region39: #{tpu_custom_call.1} parent=1 // pred_check_branch
      %65 = sbr.rel (0) target = $region41
    $region40: #{tpu_custom_call.1} parent=1 // pred_region
      _
    $region41: #{tpu_custom_call.1} parent=1 // pred_fallthru
      _
    // Predicated region
    $region42: #{tpu_custom_call.1} parent=1 // pred_check
      _
    $region43: #{tpu_custom_call.1} parent=1 // pred_check_branch
      %67 = sbr.rel (0) target = $region45
    $region44: #{tpu_custom_call.1} parent=1 // pred_region
      %69 = vsyncadd [#allocation6], 0
      %s70 = sshll.u32 %s10, 4
      %s71 = int_to_ptr.hbm [resolvable:$true] %s70
      %s72 = sshll.u32 [#allocation7], 4
      %s73 = int_to_ptr.vmem [resolvable:$true] %s72
      %78 = dma.hbm_to_vmem [thread:$0]  %s71, 256, %s73, [#allocation6], 64, 64, 4
    $region45: #{tpu_custom_call.1} parent=1 // pred_fallthru
      _
    // Predicated region
    $region46: #{tpu_custom_call.1} parent=1 // pred_check
      _
    $region47: #{tpu_custom_call.1} parent=1 // pred_check_branch
      %80 = sbr.rel (0) target = $region49
    $region48: #{tpu_custom_call.1} parent=1 // pred_region
      _
    $region49: #{tpu_custom_call.1} parent=1 // pred_fallthru
      _
    // Predicated region
    $region50: #{tpu_custom_call.1} parent=1 // pred_check
      _
    $region51: #{tpu_custom_call.1} parent=1 // pred_check_branch
      %82 = sbr.rel (0) target = $region53
    $region52: #{tpu_custom_call.1} parent=1 // pred_region
      _
    $region53: #{tpu_custom_call.1} parent=1 // pred_fallthru
      _
    // Predicated region
    $region54: #{tpu_custom_call.1} parent=1 // pred_check
      _
    $region55: #{tpu_custom_call.1} parent=1 // pred_check_branch
      %84 = sbr.rel (0) target = $region57
    $region56: #{tpu_custom_call.1} parent=1 // pred_region
      _
    $region57: #{tpu_custom_call.1} parent=1 // pred_fallthru
      _
    // Predicated region
    $region58: #{tpu_custom_call.1} parent=1 // pred_check
      _
    $region59: #{tpu_custom_call.1} parent=1 // pred_check_branch
      %86 = sbr.rel (0) target = $region61
    $region60: #{tpu_custom_call.1} parent=1 // pred_region
      _
    $region61: #{tpu_custom_call.1} parent=1 // pred_fallthru
      _
    // Predicated region
    $region62: #{tpu_custom_call.1} parent=1 // pred_check
      _
    $region63: #{tpu_custom_call.1} parent=1 // pred_check_branch
      %88 = sbr.rel (0) target = $region65
    $region64: #{tpu_custom_call.1} parent=1 // pred_region
      _
    $region65: #{tpu_custom_call.1} parent=1 // pred_fallthru
      _
    // Predicated region
    $region66: #{tpu_custom_call.1} parent=1 // pred_check
      _
    $region67: #{tpu_custom_call.1} parent=1 // pred_check_branch
      %90 = sbr.rel (0) target = $region69
    $region68: #{tpu_custom_call.1} parent=1 // pred_region
      %92 = dma.done [#allocation3], 128
    $region69: #{tpu_custom_call.1} parent=1 // pred_fallthru
      _
    // Predicated region
    $region70: #{tpu_custom_call.1} parent=1 // pred_check
      _
    $region71: #{tpu_custom_call.1} parent=1 // pred_check_branch
      %94 = sbr.rel (0) target = $region73
    $region72: #{tpu_custom_call.1} parent=1 // pred_region
      %96 = dma.done [#allocation6], 128
    $region73: #{tpu_custom_call.1} parent=1 // pred_fallthru
      _
    // Predicated region
    $region74: #{tpu_custom_call.1} parent=1 // pred_check
      _
    $region75: #{tpu_custom_call.1} parent=1 // pred_check_branch
      %98 = sbr.rel (0) target = $region77
    $region76: #{tpu_custom_call.1} parent=1 // pred_region
      %100 = dma.done [#allocation6], 256
    $region77: #{tpu_custom_call.1} parent=1 // pred_fallthru
      _
    %v102 = vld [vmem:[#allocation2] sm:$0xf]
    %v103 = vld [vmem:[#allocation2 + $0x4] sm:$0xf]
    %v104 = vld [vmem:[#allocation5] sm:$0xf]
    %v105 = vld [vmem:[#allocation5 + $0x4] sm:$0xf]
    %v106 = vld [vmem:[%s2] sm:$0xff]
    %v107 = vld [vmem:[%s2 + $0x8] sm:$0xff]
    %v108 = vld [vmem:[%s3] sm:$0xf]
    %v109 = vld [vmem:[%s3 + $0x4] sm:$0xf]
    %v110 = vld [vmem:[%s3 + $0x8] sm:$0xf]
    %v111 = vld [vmem:[%s3 + $0xc] sm:$0xf]
    %v114 = vunpack.c.l.b16 %v102
    %v115 = vunpack.c.l.b16 %v103
    %v116 = vpack.c.b16 %v115, %v114
    %v121 = vunpack.c.l.b16 %v108
    %v122 = vunpack.c.l.b16 %v109
    %v123 = vunpack.c.l.b16 %v110
    %v124 = vunpack.c.l.b16 %v111
    %v125 = vpack.c.b16 %v122, %v121
    %v126 = vpack.c.b16 %v124, %v123
    %vm129 = vcmask 261120
    %v131 = vsel %vm129, %v116, 0
    %133 = vmatpush.bf16.msra.mxu0 0
    %134 = vmatpush.bf16.msra.mxu0 0
    %135 = vmatpush.bf16.msra.mxu0 0
    %136 = vmatpush.bf16.msra.mxu0 0
    %137 = vmatpush.bf16.msra.mxu0 0
    %138 = vmatpush.bf16.msra.mxu0 0
    %139 = vmatpush.bf16.msra.mxu0 %v126
    %140 = vmatpush.bf16.msra.mxu0 %v125
    %141 = vmatmul.bf16.gmra.mxu0 %v131
    %v142 = vpop.f32.mrf.mxu0
    %v143 = vadd.f32 0.0, %v142
    %v144 = vpop.f32.mrf.mxu0
    %v145 = vadd.f32 0.0, %v144
    %146 = vdwg.mxu0
    %v147 = vld [vmem:[%s4] sm:$0xf]
    %v148 = vld [vmem:[%s4 + $0x4] sm:$0xf]
    %v149 = vld [vmem:[%s4 + $0x8] sm:$0xf]
    %v150 = vld [vmem:[%s4 + $0xc] sm:$0xf]
    %v153 = vunpack.c.l.b16 %v104
    %v154 = vunpack.c.l.b16 %v105
    %v155 = vpack.c.b16 %v154, %v153
    %v160 = vunpack.c.l.b16 %v147
    %v161 = vunpack.c.l.b16 %v148
    %v162 = vunpack.c.l.b16 %v149
    %v163 = vunpack.c.l.b16 %v150
    %v164 = vpack.c.b16 %v161, %v160
    %v165 = vpack.c.b16 %v163, %v162
    %v169 = vsel %vm129, %v155, 0
    %171 = vmatpush.bf16.msra.mxu0 0
    %172 = vmatpush.bf16.msra.mxu0 0
    %173 = vmatpush.bf16.msra.mxu0 0
    %174 = vmatpush.bf16.msra.mxu0 0
    %175 = vmatpush.bf16.msra.mxu0 0
    %176 = vmatpush.bf16.msra.mxu0 0
    %177 = vmatpush.bf16.msra.mxu0 %v165
    %178 = vmatpush.bf16.msra.mxu0 %v164
    %179 = vmatmul.bf16.gmra.mxu0 %v169
    %v180 = vpop.f32.mrf.mxu0
    %v181 = vadd.f32 0.0, %v180
    %v182 = vpop.f32.mrf.mxu0
    %v183 = vadd.f32 0.0, %v182
    %184 = vdwg.mxu0
    %v185 = vpack.c.bf16 %v107, %v106
    %v186 = vld [vmem:[%s5] sm:$0xf]
    %v187 = vld [vmem:[%s5 + $0x4] sm:$0xf]
    %v188 = vld [vmem:[%s5 + $0x8] sm:$0xf]
    %v189 = vld [vmem:[%s5 + $0xc] sm:$0xf]
    %v194 = vunpack.c.l.b16 %v186
    %v195 = vunpack.c.l.b16 %v187
    %v196 = vunpack.c.l.b16 %v188
    %v197 = vunpack.c.l.b16 %v189
    %v198 = vpack.c.b16 %v195, %v194
    %v199 = vpack.c.b16 %v197, %v196
    %v203 = vsel %vm129, %v185, 0
    %205 = vmatpush.bf16.msra.mxu0 0
    %206 = vmatpush.bf16.msra.mxu0 0
    %207 = vmatpush.bf16.msra.mxu0 0
    %208 = vmatpush.bf16.msra.mxu0 0
    %209 = vmatpush.bf16.msra.mxu0 0
    %210 = vmatpush.bf16.msra.mxu0 0
    %211 = vmatpush.bf16.msra.mxu0 %v199
    %212 = vmatpush.bf16.msra.mxu0 %v198
    %213 = vmatmul.bf16.gmra.mxu0 %v203
    %v214 = vpop.f32.mrf.mxu0
    %v215 = vadd.f32 0.0, %v214
    %v216 = vpop.f32.mrf.mxu0
    %v217 = vadd.f32 0.0, %v216
    %218 = vdwg.mxu0
    %v219 = vld [vmem:[%s6] sm:$0xf]
    %v220 = vld [vmem:[%s6 + $0x4] sm:$0xf]
    %v221 = vld [vmem:[%s6 + $0x8] sm:$0xf]
    %v222 = vld [vmem:[%s6 + $0xc] sm:$0xf]
    %v223 = vld [vmem:[%s7] sm:$0x1]
    %v224 = vld [vmem:[%s8] sm:$0x1]
    %v225 = vld [vmem:[%s9] sm:$0x1]
    %v226 = vld [vmem:[#allocation7] sm:$0xf]
    %v227 = vld [vmem:[#allocation7 + $0x4] sm:$0xf]
    %v228 = vld [vmem:[#allocation7 + $0x8] sm:$0xf]
    %v229 = vld [vmem:[#allocation7 + $0xc] sm:$0xf]
    %v230 = vld [vmem:[%s11] sm:$0x1]
    %v231 = vld [vmem:[%s12] sm:$0xf]
    %v232 = vld [vmem:[%s12 + $0x4] sm:$0xf]
    %v233 = vld [vmem:[%s12 + $0x8] sm:$0xf]
    %v234 = vld [vmem:[%s12 + $0xc] sm:$0xf]
    %v235 = vld [vmem:[%s12 + $0x10] sm:$0xf]
    %v236 = vld [vmem:[%s12 + $0x14] sm:$0xf]
    %v237 = vld [vmem:[%s12 + $0x18] sm:$0xf]
    %v238 = vld [vmem:[%s12 + $0x1c] sm:$0xf]
    %v239 = vld [vmem:[%s12 + $0x20] sm:$0xf]
    %v240 = vld [vmem:[%s12 + $0x24] sm:$0xf]
    %v241 = vld [vmem:[%s12 + $0x28] sm:$0xf]
    %v242 = vld [vmem:[%s12 + $0x2c] sm:$0xf]
    %v243 = vld [vmem:[%s12 + $0x30] sm:$0xf]
    %v244 = vld [vmem:[%s12 + $0x34] sm:$0xf]
    %v245 = vld [vmem:[%s12 + $0x38] sm:$0xf]
    %v246 = vld [vmem:[%s12 + $0x3c] sm:$0xf]
    %v247 = vld [vmem:[%s13] sm:$0x1]
    %v248 = vld [vmem:[%s14] sm:$0x1]
    %v249 = vld [vmem:[%s15] sm:$0x1]
    %252 = vrot.lane.b32.xlu0 %v215, 120
    %v253 = vpop.permute.xlu0 %252
    %254 = vrot.lane.b32.xlu0 %v217, 120
    %v255 = vpop.permute.xlu0 %254
    %258 = vrot.lane.b32.xlu0 %v215, 112
    %v259 = vpop.permute.xlu0 %258
    %260 = vrot.lane.b32.xlu0 %v217, 112
    %v261 = vpop.permute.xlu0 %260
    %264 = vrot.lane.b32.xlu0 %v215, 104
    %v265 = vpop.permute.xlu0 %264
    %266 = vrot.lane.b32.xlu0 %v217, 104
    %v267 = vpop.permute.xlu0 %266
    %v270 = vrot.slane %v259, 4
    %vm271 = vcmask 1047556
    %v272 = vsel %vm271, %v270, %v215
    %v273 = vrot.slane %v215, 4
    %v274 = vsel %vm271, %v259, %v273
    %v276 = vunpack.c.l.s4 1983009808
    %v277 = vunpack.c.0.s8 %v276
    %v278 = vperm.slane %v272, %v277
    %v280 = vunpack.c.l.s4 1983009808
    %v281 = vunpack.c.0.s8 %v280
    %v282 = vperm.slane %v274, %v281
    %v283 = vrot.slane %v265, 4
    %v284 = vsel %vm271, %v283, %v253
    %v285 = vrot.slane %v253, 4
    %v286 = vsel %vm271, %v265, %v285
    %v288 = vunpack.c.l.s4 1983009808
    %v289 = vunpack.c.0.s8 %v288
    %v290 = vperm.slane %v284, %v289
    %v292 = vunpack.c.l.s4 1983009808
    %v293 = vunpack.c.0.s8 %v292
    %v294 = vperm.slane %v286, %v293
    %v295 = vrot.slane %v290, 4
    %v296 = vsel %vm271, %v295, %v278
    %v297 = vrot.slane %v278, 4
    %v298 = vsel %vm271, %v290, %v297
    %v300 = vunpack.c.l.s4 1934713408
    %v301 = vunpack.c.0.s8 %v300
    %v302 = vperm.slane %v296, %v301
    %v304 = vunpack.c.l.s4 1934713408
    %v305 = vunpack.c.0.s8 %v304
    %v306 = vperm.slane %v298, %v305
    %v307 = vrot.slane %v294, 4
    %v308 = vsel %vm271, %v307, %v282
    %v309 = vrot.slane %v282, 4
    %v310 = vsel %vm271, %v294, %v309
    %v312 = vunpack.c.l.s4 1934713408
    %v313 = vunpack.c.0.s8 %v312
    %v314 = vperm.slane %v308, %v313
    %v316 = vunpack.c.l.s4 1934713408
    %v317 = vunpack.c.0.s8 %v316
    %v318 = vperm.slane %v310, %v317
    %v319 = vrot.slane %v302, 4
    %v320 = vsel %vm271, 0.0, %v319
    %v321 = vrot.slane %v306, 4
    %v322 = vsel %vm271, 0.0, %v321
    %v323 = vrot.slane %v314, 4
    %v324 = vsel %vm271, 0.0, %v323
    %v325 = vrot.slane %v318, 4
    %v326 = vsel %vm271, 0.0, %v325
    %v327 = vrot.slane %v261, 4
    %v328 = vsel %vm271, %v327, %v217
    %v329 = vrot.slane %v217, 4
    %v330 = vsel %vm271, %v261, %v329
    %v332 = vunpack.c.l.s4 1983009808
    %v333 = vunpack.c.0.s8 %v332
    %v334 = vperm.slane %v328, %v333
    %v336 = vunpack.c.l.s4 1983009808
    %v337 = vunpack.c.0.s8 %v336
    %v338 = vperm.slane %v330, %v337
    %v339 = vrot.slane %v267, 4
    %v340 = vsel %vm271, %v339, %v255
    %v341 = vrot.slane %v255, 4
    %v342 = vsel %vm271, %v267, %v341
    %v344 = vunpack.c.l.s4 1983009808
    %v345 = vunpack.c.0.s8 %v344
    %v346 = vperm.slane %v340, %v345
    %v348 = vunpack.c.l.s4 1983009808
    %v349 = vunpack.c.0.s8 %v348
    %v350 = vperm.slane %v342, %v349
    %v351 = vrot.slane %v346, 4
    %v352 = vsel %vm271, %v351, %v334
    %v353 = vrot.slane %v334, 4
    %v354 = vsel %vm271, %v346, %v353
    %v356 = vunpack.c.l.s4 1934713408
    %v357 = vunpack.c.0.s8 %v356
    %v358 = vperm.slane %v352, %v357
    %v360 = vunpack.c.l.s4 1934713408
    %v361 = vunpack.c.0.s8 %v360
    %v362 = vperm.slane %v354, %v361
    %v363 = vrot.slane %v350, 4
    %v364 = vsel %vm271, %v363, %v338
    %v365 = vrot.slane %v338, 4
    %v366 = vsel %vm271, %v350, %v365
    %v368 = vunpack.c.l.s4 1934713408
    %v369 = vunpack.c.0.s8 %v368
    %v370 = vperm.slane %v364, %v369
    %v372 = vunpack.c.l.s4 1934713408
    %v373 = vunpack.c.0.s8 %v372
    %v374 = vperm.slane %v366, %v373
    %v375 = vrot.slane %v358, 4
    %v376 = vsel %vm271, 0.0, %v375
    %v377 = vrot.slane %v362, 4
    %v378 = vsel %vm271, 0.0, %v377
    %v379 = vrot.slane %v370, 4
    %v380 = vsel %vm271, 0.0, %v379
    %v381 = vrot.slane %v374, 4
    %v382 = vsel %vm271, 0.0, %v381
    %v383 = vsel %vm271, %v321, %v302
    %v385 = vunpack.c.l.s4 1983009808
    %v386 = vunpack.c.0.s8 %v385
    %v387 = vperm.slane %v383, %v386
    %v388 = vrot.slane %v322, 4
    %v389 = vsel %vm271, %v388, %v320
    %v391 = vunpack.c.l.s4 1983009808
    %v392 = vunpack.c.0.s8 %v391
    %v393 = vperm.slane %v389, %v392
    %v394 = vsel %vm271, %v325, %v314
    %v396 = vunpack.c.l.s4 1983009808
    %v397 = vunpack.c.0.s8 %v396
    %v398 = vperm.slane %v394, %v397
    %v399 = vrot.slane %v326, 4
    %v400 = vsel %vm271, %v399, %v324
    %v402 = vunpack.c.l.s4 1983009808
    %v403 = vunpack.c.0.s8 %v402
    %v404 = vperm.slane %v400, %v403
    %v405 = vrot.slane %v393, 4
    %v406 = vsel %vm271, %v405, %v387
    %v407 = vrot.slane %v387, 4
    %v408 = vsel %vm271, %v393, %v407
    %v410 = vunpack.c.l.s4 1934713408
    %v411 = vunpack.c.0.s8 %v410
    %v412 = vperm.slane %v406, %v411
    %v414 = vunpack.c.l.s4 1934713408
    %v415 = vunpack.c.0.s8 %v414
    %v416 = vperm.slane %v408, %v415
    %v417 = vrot.slane %v404, 4
    %v418 = vsel %vm271, %v417, %v398
    %v419 = vrot.slane %v398, 4
    %v420 = vsel %vm271, %v404, %v419
    %v422 = vunpack.c.l.s4 1934713408
    %v423 = vunpack.c.0.s8 %v422
    %v424 = vperm.slane %v418, %v423
    %v426 = vunpack.c.l.s4 1934713408
    %v427 = vunpack.c.0.s8 %v426
    %v428 = vperm.slane %v420, %v427
    %v429 = vrot.slane %v424, 4
    %v430 = vsel %vm271, %v429, %v412
    %v431 = vrot.slane %v412, 4
    %v432 = vsel %vm271, %v424, %v431
    %v433 = vrot.slane %v428, 4
    %v434 = vsel %vm271, %v433, %v416
    %v435 = vrot.slane %v416, 4
    %v436 = vsel %vm271, %v428, %v435
    %v437 = vsel %vm271, %v377, %v358
    %v439 = vunpack.c.l.s4 1983009808
    %v440 = vunpack.c.0.s8 %v439
    %v441 = vperm.slane %v437, %v440
    %v442 = vrot.slane %v378, 4
    %v443 = vsel %vm271, %v442, %v376
    %v445 = vunpack.c.l.s4 1983009808
    %v446 = vunpack.c.0.s8 %v445
    %v447 = vperm.slane %v443, %v446
    %v448 = vsel %vm271, %v381, %v370
    %v450 = vunpack.c.l.s4 1983009808
    %v451 = vunpack.c.0.s8 %v450
    %v452 = vperm.slane %v448, %v451
    %v453 = vrot.slane %v382, 4
    %v454 = vsel %vm271, %v453, %v380
    %v456 = vunpack.c.l.s4 1983009808
    %v457 = vunpack.c.0.s8 %v456
    %v458 = vperm.slane %v454, %v457
    %v459 = vrot.slane %v447, 4
    %v460 = vsel %vm271, %v459, %v441
    %v461 = vrot.slane %v441, 4
    %v462 = vsel %vm271, %v447, %v461
    %v464 = vunpack.c.l.s4 1934713408
    %v465 = vunpack.c.0.s8 %v464
    %v466 = vperm.slane %v460, %v465
    %v468 = vunpack.c.l.s4 1934713408
    %v469 = vunpack.c.0.s8 %v468
    %v470 = vperm.slane %v462, %v469
    %v471 = vrot.slane %v458, 4
    %v472 = vsel %vm271, %v471, %v452
    %v473 = vrot.slane %v452, 4
    %v474 = vsel %vm271, %v458, %v473
    %v476 = vunpack.c.l.s4 1934713408
    %v477 = vunpack.c.0.s8 %v476
    %v478 = vperm.slane %v472, %v477
    %v480 = vunpack.c.l.s4 1934713408
    %v481 = vunpack.c.0.s8 %v480
    %v482 = vperm.slane %v474, %v481
    %v483 = vrot.slane %v478, 4
    %v484 = vsel %vm271, %v483, %v466
    %v485 = vrot.slane %v466, 4
    %v486 = vsel %vm271, %v478, %v485
    %v487 = vrot.slane %v482, 4
    %v488 = vsel %vm271, %v487, %v470
    %v489 = vrot.slane %v470, 4
    %v490 = vsel %vm271, %v482, %v489
    %v491 = vpack.c.bf16 %v430, %v430
    %v492 = vpack.c.bf16 %v432, %v432
    %v493 = vpack.c.bf16 %v434, %v434
    %v494 = vpack.c.bf16 %v436, %v436
    %v495 = vpack.c.bf16 %v484, %v484
    %v496 = vpack.c.bf16 %v486, %v486
    %v497 = vpack.c.bf16 %v488, %v488
    %v498 = vpack.c.bf16 %v490, %v490
    %501 = vrot.lane.b32.xlu0 %v181, 120
    %v502 = vpop.permute.xlu0 %501
    %503 = vrot.lane.b32.xlu0 %v183, 120
    %v504 = vpop.permute.xlu0 %503
    %507 = vrot.lane.b32.xlu0 %v181, 112
    %v508 = vpop.permute.xlu0 %507
    %509 = vrot.lane.b32.xlu0 %v183, 112
    %v510 = vpop.permute.xlu0 %509
    %513 = vrot.lane.b32.xlu0 %v181, 104
    %v514 = vpop.permute.xlu0 %513
    %515 = vrot.lane.b32.xlu0 %v183, 104
    %v516 = vpop.permute.xlu0 %515
    %v519 = vrot.slane %v508, 4
    %v520 = vsel %vm271, %v519, %v181
    %v521 = vrot.slane %v181, 4
    %v522 = vsel %vm271, %v508, %v521
    %v524 = vunpack.c.l.s4 1983009808
    %v525 = vunpack.c.0.s8 %v524
    %v526 = vperm.slane %v520, %v525
    %v528 = vunpack.c.l.s4 1983009808
    %v529 = vunpack.c.0.s8 %v528
    %v530 = vperm.slane %v522, %v529
    %v531 = vrot.slane %v514, 4
    %v532 = vsel %vm271, %v531, %v502
    %v533 = vrot.slane %v502, 4
    %v534 = vsel %vm271, %v514, %v533
    %v536 = vunpack.c.l.s4 1983009808
    %v537 = vunpack.c.0.s8 %v536
    %v538 = vperm.slane %v532, %v537
    %v540 = vunpack.c.l.s4 1983009808
    %v541 = vunpack.c.0.s8 %v540
    %v542 = vperm.slane %v534, %v541
    %v543 = vrot.slane %v538, 4
    %v544 = vsel %vm271, %v543, %v526
    %v545 = vrot.slane %v526, 4
    %v546 = vsel %vm271, %v538, %v545
    %v548 = vunpack.c.l.s4 1934713408
    %v549 = vunpack.c.0.s8 %v548
    %v550 = vperm.slane %v544, %v549
    %v552 = vunpack.c.l.s4 1934713408
    %v553 = vunpack.c.0.s8 %v552
    %v554 = vperm.slane %v546, %v553
    %v555 = vrot.slane %v542, 4
    %v556 = vsel %vm271, %v555, %v530
    %v557 = vrot.slane %v530, 4
    %v558 = vsel %vm271, %v542, %v557
    %v560 = vunpack.c.l.s4 1934713408
    %v561 = vunpack.c.0.s8 %v560
    %v562 = vperm.slane %v556, %v561
    %v564 = vunpack.c.l.s4 1934713408
    %v565 = vunpack.c.0.s8 %v564
    %v566 = vperm.slane %v558, %v565
    %v567 = vrot.slane %v550, 4
    %v568 = vsel %vm271, 0.0, %v567
    %v569 = vrot.slane %v554, 4
    %v570 = vsel %vm271, 0.0, %v569
    %v571 = vrot.slane %v562, 4
    %v572 = vsel %vm271, 0.0, %v571
    %v573 = vrot.slane %v566, 4
    %v574 = vsel %vm271, 0.0, %v573
    %v575 = vrot.slane %v510, 4
    %v576 = vsel %vm271, %v575, %v183
    %v577 = vrot.slane %v183, 4
    %v578 = vsel %vm271, %v510, %v577
    %v580 = vunpack.c.l.s4 1983009808
    %v581 = vunpack.c.0.s8 %v580
    %v582 = vperm.slane %v576, %v581
    %v584 = vunpack.c.l.s4 1983009808
    %v585 = vunpack.c.0.s8 %v584
    %v586 = vperm.slane %v578, %v585
    %v587 = vrot.slane %v516, 4
    %v588 = vsel %vm271, %v587, %v504
    %v589 = vrot.slane %v504, 4
    %v590 = vsel %vm271, %v516, %v589
    %v592 = vunpack.c.l.s4 1983009808
    %v593 = vunpack.c.0.s8 %v592
    %v594 = vperm.slane %v588, %v593
    %v596 = vunpack.c.l.s4 1983009808
    %v597 = vunpack.c.0.s8 %v596
    %v598 = vperm.slane %v590, %v597
    %v599 = vrot.slane %v594, 4
    %v600 = vsel %vm271, %v599, %v582
    %v601 = vrot.slane %v582, 4
    %v602 = vsel %vm271, %v594, %v601
    %v604 = vunpack.c.l.s4 1934713408
    %v605 = vunpack.c.0.s8 %v604
    %v606 = vperm.slane %v600, %v605
    %v608 = vunpack.c.l.s4 1934713408
    %v609 = vunpack.c.0.s8 %v608
    %v610 = vperm.slane %v602, %v609
    %v611 = vrot.slane %v598, 4
    %v612 = vsel %vm271, %v611, %v586
    %v613 = vrot.slane %v586, 4
    %v614 = vsel %vm271, %v598, %v613
    %v616 = vunpack.c.l.s4 1934713408
    %v617 = vunpack.c.0.s8 %v616
    %v618 = vperm.slane %v612, %v617
    %v620 = vunpack.c.l.s4 1934713408
    %v621 = vunpack.c.0.s8 %v620
    %v622 = vperm.slane %v614, %v621
    %v623 = vrot.slane %v606, 4
    %v624 = vsel %vm271, 0.0, %v623
    %v625 = vrot.slane %v610, 4
    %v626 = vsel %vm271, 0.0, %v625
    %v627 = vrot.slane %v618, 4
    %v628 = vsel %vm271, 0.0, %v627
    %v629 = vrot.slane %v622, 4
    %v630 = vsel %vm271, 0.0, %v629
    %v631 = vsel %vm271, %v569, %v550
    %v633 = vunpack.c.l.s4 1983009808
    %v634 = vunpack.c.0.s8 %v633
    %v635 = vperm.slane %v631, %v634
    %v636 = vrot.slane %v570, 4
    %v637 = vsel %vm271, %v636, %v568
    %v639 = vunpack.c.l.s4 1983009808
    %v640 = vunpack.c.0.s8 %v639
    %v641 = vperm.slane %v637, %v640
    %v642 = vsel %vm271, %v573, %v562
    %v644 = vunpack.c.l.s4 1983009808
    %v645 = vunpack.c.0.s8 %v644
    %v646 = vperm.slane %v642, %v645
    %v647 = vrot.slane %v574, 4
    %v648 = vsel %vm271, %v647, %v572
    %v650 = vunpack.c.l.s4 1983009808
    %v651 = vunpack.c.0.s8 %v650
    %v652 = vperm.slane %v648, %v651
    %v653 = vrot.slane %v641, 4
    %v654 = vsel %vm271, %v653, %v635
    %v655 = vrot.slane %v635, 4
    %v656 = vsel %vm271, %v641, %v655
    %v658 = vunpack.c.l.s4 1934713408
    %v659 = vunpack.c.0.s8 %v658
    %v660 = vperm.slane %v654, %v659
    %v662 = vunpack.c.l.s4 1934713408
    %v663 = vunpack.c.0.s8 %v662
    %v664 = vperm.slane %v656, %v663
    %v665 = vrot.slane %v652, 4
    %v666 = vsel %vm271, %v665, %v646
    %v667 = vrot.slane %v646, 4
    %v668 = vsel %vm271, %v652, %v667
    %v670 = vunpack.c.l.s4 1934713408
    %v671 = vunpack.c.0.s8 %v670
    %v672 = vperm.slane %v666, %v671
    %v674 = vunpack.c.l.s4 1934713408
    %v675 = vunpack.c.0.s8 %v674
    %v676 = vperm.slane %v668, %v675
    %v677 = vrot.slane %v672, 4
    %v678 = vsel %vm271, %v677, %v660
    %v679 = vrot.slane %v660, 4
    %v680 = vsel %vm271, %v672, %v679
    %v681 = vrot.slane %v676, 4
    %v682 = vsel %vm271, %v681, %v664
    %v683 = vrot.slane %v664, 4
    %v684 = vsel %vm271, %v676, %v683
    %v685 = vsel %vm271, %v625, %v606
    %v687 = vunpack.c.l.s4 1983009808
    %v688 = vunpack.c.0.s8 %v687
    %v689 = vperm.slane %v685, %v688
    %v690 = vrot.slane %v626, 4
    %v691 = vsel %vm271, %v690, %v624
    %v693 = vunpack.c.l.s4 1983009808
    %v694 = vunpack.c.0.s8 %v693
    %v695 = vperm.slane %v691, %v694
    %v696 = vsel %vm271, %v629, %v618
    %v698 = vunpack.c.l.s4 1983009808
    %v699 = vunpack.c.0.s8 %v698
    %v700 = vperm.slane %v696, %v699
    %v701 = vrot.slane %v630, 4
    %v702 = vsel %vm271, %v701, %v628
    %v704 = vunpack.c.l.s4 1983009808
    %v705 = vunpack.c.0.s8 %v704
    %v706 = vperm.slane %v702, %v705
    %v707 = vrot.slane %v695, 4
    %v708 = vsel %vm271, %v707, %v689
    %v709 = vrot.slane %v689, 4
    %v710 = vsel %vm271, %v695, %v709
    %v712 = vunpack.c.l.s4 1934713408
    %v713 = vunpack.c.0.s8 %v712
    %v714 = vperm.slane %v708, %v713
    %v716 = vunpack.c.l.s4 1934713408
    %v717 = vunpack.c.0.s8 %v716
    %v718 = vperm.slane %v710, %v717
    %v719 = vrot.slane %v706, 4
    %v720 = vsel %vm271, %v719, %v700
    %v721 = vrot.slane %v700, 4
    %v722 = vsel %vm271, %v706, %v721
    %v724 = vunpack.c.l.s4 1934713408
    %v725 = vunpack.c.0.s8 %v724
    %v726 = vperm.slane %v720, %v725
    %v728 = vunpack.c.l.s4 1934713408
    %v729 = vunpack.c.0.s8 %v728
    %v730 = vperm.slane %v722, %v729
    %v731 = vrot.slane %v726, 4
    %v732 = vsel %vm271, %v731, %v714
    %v733 = vrot.slane %v714, 4
    %v734 = vsel %vm271, %v726, %v733
    %v735 = vrot.slane %v730, 4
    %v736 = vsel %vm271, %v735, %v718
    %v737 = vrot.slane %v718, 4
    %v738 = vsel %vm271, %v730, %v737
    %v739 = vpack.c.bf16 %v678, %v678
    %v740 = vpack.c.bf16 %v680, %v680
    %v741 = vpack.c.bf16 %v682, %v682
    %v742 = vpack.c.bf16 %v684, %v684
    %v743 = vpack.c.bf16 %v732, %v732
    %v744 = vpack.c.bf16 %v734, %v734
    %v745 = vpack.c.bf16 %v736, %v736
    %v746 = vpack.c.bf16 %v738, %v738
    %749 = vrot.lane.b32.xlu0 %v143, 120
    %v750 = vpop.permute.xlu0 %749
    %751 = vrot.lane.b32.xlu0 %v145, 120
    %v752 = vpop.permute.xlu0 %751
    %755 = vrot.lane.b32.xlu0 %v143, 112
    %v756 = vpop.permute.xlu0 %755
    %757 = vrot.lane.b32.xlu0 %v145, 112
    %v758 = vpop.permute.xlu0 %757
    %761 = vrot.lane.b32.xlu0 %v143, 104
    %v762 = vpop.permute.xlu0 %761
    %763 = vrot.lane.b32.xlu0 %v145, 104
    %v764 = vpop.permute.xlu0 %763
    %v767 = vrot.slane %v756, 4
    %v768 = vsel %vm271, %v767, %v143
    %v769 = vrot.slane %v143, 4
    %v770 = vsel %vm271, %v756, %v769
    %v772 = vunpack.c.l.s4 1983009808
    %v773 = vunpack.c.0.s8 %v772
    %v774 = vperm.slane %v768, %v773
    %v776 = vunpack.c.l.s4 1983009808
    %v777 = vunpack.c.0.s8 %v776
    %v778 = vperm.slane %v770, %v777
    %v779 = vrot.slane %v762, 4
    %v780 = vsel %vm271, %v779, %v750
    %v781 = vrot.slane %v750, 4
    %v782 = vsel %vm271, %v762, %v781
    %v784 = vunpack.c.l.s4 1983009808
    %v785 = vunpack.c.0.s8 %v784
    %v786 = vperm.slane %v780, %v785
    %v788 = vunpack.c.l.s4 1983009808
    %v789 = vunpack.c.0.s8 %v788
    %v790 = vperm.slane %v782, %v789
    %v791 = vrot.slane %v786, 4
    %v792 = vsel %vm271, %v791, %v774
    %v793 = vrot.slane %v774, 4
    %v794 = vsel %vm271, %v786, %v793
    %v796 = vunpack.c.l.s4 1934713408
    %v797 = vunpack.c.0.s8 %v796
    %v798 = vperm.slane %v792, %v797
    %v800 = vunpack.c.l.s4 1934713408
    %v801 = vunpack.c.0.s8 %v800
    %v802 = vperm.slane %v794, %v801
    %v803 = vrot.slane %v790, 4
    %v804 = vsel %vm271, %v803, %v778
    %v805 = vrot.slane %v778, 4
    %v806 = vsel %vm271, %v790, %v805
    %v808 = vunpack.c.l.s4 1934713408
    %v809 = vunpack.c.0.s8 %v808
    %v810 = vperm.slane %v804, %v809
    %v812 = vunpack.c.l.s4 1934713408
    %v813 = vunpack.c.0.s8 %v812
    %v814 = vperm.slane %v806, %v813
    %v815 = vrot.slane %v798, 4
    %v816 = vsel %vm271, 0.0, %v815
    %v817 = vrot.slane %v802, 4
    %v818 = vsel %vm271, 0.0, %v817
    %v819 = vrot.slane %v810, 4
    %v820 = vsel %vm271, 0.0, %v819
    %v821 = vrot.slane %v814, 4
    %v822 = vsel %vm271, 0.0, %v821
    %v823 = vrot.slane %v758, 4
    %v824 = vsel %vm271, %v823, %v145
    %v825 = vrot.slane %v145, 4
    %v826 = vsel %vm271, %v758, %v825
    %v828 = vunpack.c.l.s4 1983009808
    %v829 = vunpack.c.0.s8 %v828
    %v830 = vperm.slane %v824, %v829
    %v832 = vunpack.c.l.s4 1983009808
    %v833 = vunpack.c.0.s8 %v832
    %v834 = vperm.slane %v826, %v833
    %v835 = vrot.slane %v764, 4
    %v836 = vsel %vm271, %v835, %v752
    %v837 = vrot.slane %v752, 4
    %v838 = vsel %vm271, %v764, %v837
    %v840 = vunpack.c.l.s4 1983009808
    %v841 = vunpack.c.0.s8 %v840
    %v842 = vperm.slane %v836, %v841
    %v844 = vunpack.c.l.s4 1983009808
    %v845 = vunpack.c.0.s8 %v844
    %v846 = vperm.slane %v838, %v845
    %v847 = vrot.slane %v842, 4
    %v848 = vsel %vm271, %v847, %v830
    %v849 = vrot.slane %v830, 4
    %v850 = vsel %vm271, %v842, %v849
    %v852 = vunpack.c.l.s4 1934713408
    %v853 = vunpack.c.0.s8 %v852
    %v854 = vperm.slane %v848, %v853
    %v856 = vunpack.c.l.s4 1934713408
    %v857 = vunpack.c.0.s8 %v856
    %v858 = vperm.slane %v850, %v857
    %v859 = vrot.slane %v846, 4
    %v860 = vsel %vm271, %v859, %v834
    %v861 = vrot.slane %v834, 4
    %v862 = vsel %vm271, %v846, %v861
    %v864 = vunpack.c.l.s4 1934713408
    %v865 = vunpack.c.0.s8 %v864
    %v866 = vperm.slane %v860, %v865
    %v868 = vunpack.c.l.s4 1934713408
    %v869 = vunpack.c.0.s8 %v868
    %v870 = vperm.slane %v862, %v869
    %v871 = vrot.slane %v854, 4
    %v872 = vsel %vm271, 0.0, %v871
    %v873 = vrot.slane %v858, 4
    %v874 = vsel %vm271, 0.0, %v873
    %v875 = vrot.slane %v866, 4
    %v876 = vsel %vm271, 0.0, %v875
    %v877 = vrot.slane %v870, 4
    %v878 = vsel %vm271, 0.0, %v877
    %v879 = vsel %vm271, %v817, %v798
    %v881 = vunpack.c.l.s4 1983009808
    %v882 = vunpack.c.0.s8 %v881
    %v883 = vperm.slane %v879, %v882
    %v884 = vrot.slane %v818, 4
    %v885 = vsel %vm271, %v884, %v816
    %v887 = vunpack.c.l.s4 1983009808
    %v888 = vunpack.c.0.s8 %v887
    %v889 = vperm.slane %v885, %v888
    %v890 = vsel %vm271, %v821, %v810
    %v892 = vunpack.c.l.s4 1983009808
    %v893 = vunpack.c.0.s8 %v892
    %v894 = vperm.slane %v890, %v893
    %v895 = vrot.slane %v822, 4
    %v896 = vsel %vm271, %v895, %v820
    %v898 = vunpack.c.l.s4 1983009808
    %v899 = vunpack.c.0.s8 %v898
    %v900 = vperm.slane %v896, %v899
    %v901 = vrot.slane %v889, 4
    %v902 = vsel %vm271, %v901, %v883
    %v903 = vrot.slane %v883, 4
    %v904 = vsel %vm271, %v889, %v903
    %v906 = vunpack.c.l.s4 1934713408
    %v907 = vunpack.c.0.s8 %v906
    %v908 = vperm.slane %v902, %v907
    %v910 = vunpack.c.l.s4 1934713408
    %v911 = vunpack.c.0.s8 %v910
    %v912 = vperm.slane %v904, %v911
    %v913 = vrot.slane %v900, 4
    %v914 = vsel %vm271, %v913, %v894
    %v915 = vrot.slane %v894, 4
    %v916 = vsel %vm271, %v900, %v915
    %v918 = vunpack.c.l.s4 1934713408
    %v919 = vunpack.c.0.s8 %v918
    %v920 = vperm.slane %v914, %v919
    %v922 = vunpack.c.l.s4 1934713408
    %v923 = vunpack.c.0.s8 %v922
    %v924 = vperm.slane %v916, %v923
    %v925 = vrot.slane %v920, 4
    %v926 = vsel %vm271, %v925, %v908
    %v927 = vrot.slane %v908, 4
    %v928 = vsel %vm271, %v920, %v927
    %v929 = vrot.slane %v924, 4
    %v930 = vsel %vm271, %v929, %v912
    %v931 = vrot.slane %v912, 4
    %v932 = vsel %vm271, %v924, %v931
    %v933 = vsel %vm271, %v873, %v854
    %v935 = vunpack.c.l.s4 1983009808
    %v936 = vunpack.c.0.s8 %v935
    %v937 = vperm.slane %v933, %v936
    %v938 = vrot.slane %v874, 4
    %v939 = vsel %vm271, %v938, %v872
    %v941 = vunpack.c.l.s4 1983009808
    %v942 = vunpack.c.0.s8 %v941
    %v943 = vperm.slane %v939, %v942
    %v944 = vsel %vm271, %v877, %v866
    %v946 = vunpack.c.l.s4 1983009808
    %v947 = vunpack.c.0.s8 %v946
    %v948 = vperm.slane %v944, %v947
    %v949 = vrot.slane %v878, 4
    %v950 = vsel %vm271, %v949, %v876
    %v952 = vunpack.c.l.s4 1983009808
    %v953 = vunpack.c.0.s8 %v952
    %v954 = vperm.slane %v950, %v953
    %v955 = vrot.slane %v943, 4
    %v956 = vsel %vm271, %v955, %v937
    %v957 = vrot.slane %v937, 4
    %v958 = vsel %vm271, %v943, %v957
    %v960 = vunpack.c.l.s4 1934713408
    %v961 = vunpack.c.0.s8 %v960
    %v962 = vperm.slane %v956, %v961
    %v964 = vunpack.c.l.s4 1934713408
    %v965 = vunpack.c.0.s8 %v964
    %v966 = vperm.slane %v958, %v965
    %v967 = vrot.slane %v954, 4
    %v968 = vsel %vm271, %v967, %v948
    %v969 = vrot.slane %v948, 4
    %v970 = vsel %vm271, %v954, %v969
    %v972 = vunpack.c.l.s4 1934713408
    %v973 = vunpack.c.0.s8 %v972
    %v974 = vperm.slane %v968, %v973
    %v976 = vunpack.c.l.s4 1934713408
    %v977 = vunpack.c.0.s8 %v976
    %v978 = vperm.slane %v970, %v977
    %v979 = vrot.slane %v974, 4
    %v980 = vsel %vm271, %v979, %v962
    %v981 = vrot.slane %v962, 4
    %v982 = vsel %vm271, %v974, %v981
    %v983 = vrot.slane %v978, 4
    %v984 = vsel %vm271, %v983, %v966
    %v985 = vrot.slane %v966, 4
    %v986 = vsel %vm271, %v978, %v985
    %v987 = vpack.c.bf16 %v926, %v926
    %v988 = vpack.c.bf16 %v928, %v928
    %v989 = vpack.c.bf16 %v930, %v930
    %v990 = vpack.c.bf16 %v932, %v932
    %v991 = vpack.c.bf16 %v980, %v980
    %v992 = vpack.c.bf16 %v982, %v982
    %v993 = vpack.c.bf16 %v984, %v984
    %v994 = vpack.c.bf16 %v986, %v986
    %vm995 = vcmask 64512
    %v997 = vsel %vm995, %v491, 0
    %v1000 = vsel %vm995, %v739, 0
    %1002 = vmatpush.bf16.xpose.msra.mxu0 0
    %1003 = vmatpush.bf16.xpose.msra.mxu0 0
    %1004 = vmatpush.bf16.xpose.msra.mxu0 0
    %1005 = vmatpush.bf16.xpose.msra.mxu0 0
    %1006 = vmatpush.bf16.xpose.msra.mxu0 0
    %1007 = vmatpush.bf16.xpose.msra.mxu0 0
    %1008 = vmatpush.bf16.xpose.msra.mxu0 0
    %1009 = vmatpush.bf16.xpose.msra.mxu0 %v1000
    %1010 = vmatmul.bf16.gmra.mxu0 %v997
    %v1011 = vpop.f32.mrf.mxu0
    %v1012 = vadd.f32 0.0, %v1011
    %v1013 = vpop.f32.mrf.mxu0
    %1014 = vdwg.mxu0
    %v1016 = vsel %vm995, %v492, 0
    %v1019 = vsel %vm995, %v740, 0
    %1021 = vmatpush.bf16.xpose.msra.mxu0 0
    %1022 = vmatpush.bf16.xpose.msra.mxu0 0
    %1023 = vmatpush.bf16.xpose.msra.mxu0 0
    %1024 = vmatpush.bf16.xpose.msra.mxu0 0
    %1025 = vmatpush.bf16.xpose.msra.mxu0 0
    %1026 = vmatpush.bf16.xpose.msra.mxu0 0
    %1027 = vmatpush.bf16.xpose.msra.mxu0 0
    %1028 = vmatpush.bf16.xpose.msra.mxu0 %v1019
    %1029 = vmatmul.bf16.gmra.mxu0 %v1016
    %v1030 = vpop.f32.mrf.mxu0
    %v1031 = vadd.f32 0.0, %v1030
    %v1032 = vpop.f32.mrf.mxu0
    %1033 = vdwg.mxu0
    %v1035 = vsel %vm995, %v493, 0
    %v1038 = vsel %vm995, %v741, 0
    %1040 = vmatpush.bf16.xpose.msra.mxu0 0
    %1041 = vmatpush.bf16.xpose.msra.mxu0 0
    %1042 = vmatpush.bf16.xpose.msra.mxu0 0
    %1043 = vmatpush.bf16.xpose.msra.mxu0 0
    %1044 = vmatpush.bf16.xpose.msra.mxu0 0
    %1045 = vmatpush.bf16.xpose.msra.mxu0 0
    %1046 = vmatpush.bf16.xpose.msra.mxu0 0
    %1047 = vmatpush.bf16.xpose.msra.mxu0 %v1038
    %1048 = vmatmul.bf16.gmra.mxu0 %v1035
    %v1049 = vpop.f32.mrf.mxu0
    %v1050 = vadd.f32 0.0, %v1049
    %v1051 = vpop.f32.mrf.mxu0
    %1052 = vdwg.mxu0
    %v1054 = vsel %vm995, %v494, 0
    %v1057 = vsel %vm995, %v742, 0
    %1059 = vmatpush.bf16.xpose.msra.mxu0 0
    %1060 = vmatpush.bf16.xpose.msra.mxu0 0
    %1061 = vmatpush.bf16.xpose.msra.mxu0 0
    %1062 = vmatpush.bf16.xpose.msra.mxu0 0
    %1063 = vmatpush.bf16.xpose.msra.mxu0 0
    %1064 = vmatpush.bf16.xpose.msra.mxu0 0
    %1065 = vmatpush.bf16.xpose.msra.mxu0 0
    %1066 = vmatpush.bf16.xpose.msra.mxu0 %v1057
    %1067 = vmatmul.bf16.gmra.mxu0 %v1054
    %v1068 = vpop.f32.mrf.mxu0
    %v1069 = vadd.f32 0.0, %v1068
    %v1070 = vpop.f32.mrf.mxu0
    %1071 = vdwg.mxu0
    %v1073 = vsel %vm995, %v495, 0
    %v1076 = vsel %vm995, %v743, 0
    %1078 = vmatpush.bf16.xpose.msra.mxu0 0
    %1079 = vmatpush.bf16.xpose.msra.mxu0 0
    %1080 = vmatpush.bf16.xpose.msra.mxu0 0
    %1081 = vmatpush.bf16.xpose.msra.mxu0 0
    %1082 = vmatpush.bf16.xpose.msra.mxu0 0
    %1083 = vmatpush.bf16.xpose.msra.mxu0 0
    %1084 = vmatpush.bf16.xpose.msra.mxu0 0
    %1085 = vmatpush.bf16.xpose.msra.mxu0 %v1076
    %1086 = vmatmul.bf16.gmra.mxu0 %v1073
    %v1087 = vpop.f32.mrf.mxu0
    %v1088 = vadd.f32 0.0, %v1087
    %v1089 = vpop.f32.mrf.mxu0
    %1090 = vdwg.mxu0
    %v1092 = vsel %vm995, %v496, 0
    %v1095 = vsel %vm995, %v744, 0
    %1097 = vmatpush.bf16.xpose.msra.mxu0 0
    %1098 = vmatpush.bf16.xpose.msra.mxu0 0
    %1099 = vmatpush.bf16.xpose.msra.mxu0 0
    %1100 = vmatpush.bf16.xpose.msra.mxu0 0
    %1101 = vmatpush.bf16.xpose.msra.mxu0 0
    %1102 = vmatpush.bf16.xpose.msra.mxu0 0
    %1103 = vmatpush.bf16.xpose.msra.mxu0 0
    %1104 = vmatpush.bf16.xpose.msra.mxu0 %v1095
    %1105 = vmatmul.bf16.gmra.mxu0 %v1092
    %v1106 = vpop.f32.mrf.mxu0
    %v1107 = vadd.f32 0.0, %v1106
    %v1108 = vpop.f32.mrf.mxu0
    %1109 = vdwg.mxu0
    %v1111 = vsel %vm995, %v497, 0
    %v1114 = vsel %vm995, %v745, 0
    %1116 = vmatpush.bf16.xpose.msra.mxu0 0
    %1117 = vmatpush.bf16.xpose.msra.mxu0 0
    %1118 = vmatpush.bf16.xpose.msra.mxu0 0
    %1119 = vmatpush.bf16.xpose.msra.mxu0 0
    %1120 = vmatpush.bf16.xpose.msra.mxu0 0
    %1121 = vmatpush.bf16.xpose.msra.mxu0 0
    %1122 = vmatpush.bf16.xpose.msra.mxu0 0
    %1123 = vmatpush.bf16.xpose.msra.mxu0 %v1114
    %1124 = vmatmul.bf16.gmra.mxu0 %v1111
    %v1125 = vpop.f32.mrf.mxu0
    %v1126 = vadd.f32 0.0, %v1125
    %v1127 = vpop.f32.mrf.mxu0
    %1128 = vdwg.mxu0
    %v1130 = vsel %vm995, %v498, 0
    %v1133 = vsel %vm995, %v746, 0
    %1135 = vmatpush.bf16.xpose.msra.mxu0 0
    %1136 = vmatpush.bf16.xpose.msra.mxu0 0
    %1137 = vmatpush.bf16.xpose.msra.mxu0 0
    %1138 = vmatpush.bf16.xpose.msra.mxu0 0
    %1139 = vmatpush.bf16.xpose.msra.mxu0 0
    %1140 = vmatpush.bf16.xpose.msra.mxu0 0
    %1141 = vmatpush.bf16.xpose.msra.mxu0 0
    %1142 = vmatpush.bf16.xpose.msra.mxu0 %v1133
    %1143 = vmatmul.bf16.gmra.mxu0 %v1130
    %v1144 = vpop.f32.mrf.mxu0
    %v1145 = vadd.f32 0.0, %v1144
    %v1146 = vpop.f32.mrf.mxu0
    %1147 = vdwg.mxu0
    %v1148 = vsel %vm995, %v1012, -inf
    %1149 = vmax.xlane.f32.xlu0 %v1148
    %v1150 = vpop.xlane.xlu0 %1149
    %v1151 = vsel %vm995, %v1031, -inf
    %1152 = vmax.xlane.f32.xlu0 %v1151
    %v1153 = vpop.xlane.xlu0 %1152
    %v1154 = vsel %vm995, %v1050, -inf
    %1155 = vmax.xlane.f32.xlu0 %v1154
    %v1156 = vpop.xlane.xlu0 %1155
    %v1157 = vsel %vm995, %v1069, -inf
    %1158 = vmax.xlane.f32.xlu0 %v1157
    %v1159 = vpop.xlane.xlu0 %1158
    %v1160 = vsel %vm995, %v1088, -inf
    %1161 = vmax.xlane.f32.xlu0 %v1160
    %v1162 = vpop.xlane.xlu0 %1161
    %v1163 = vsel %vm995, %v1107, -inf
    %1164 = vmax.xlane.f32.xlu0 %v1163
    %v1165 = vpop.xlane.xlu0 %1164
    %v1166 = vsel %vm995, %v1126, -inf
    %1167 = vmax.xlane.f32.xlu0 %v1166
    %v1168 = vpop.xlane.xlu0 %1167
    %v1169 = vsel %vm995, %v1145, -inf
    %1170 = vmax.xlane.f32.xlu0 %v1169
    %v1171 = vpop.xlane.xlu0 %1170
    %v1172 = vsub.f32 %v1012, %v1150
    %v1173 = vsub.f32 %v1031, %v1153
    %v1174 = vsub.f32 %v1050, %v1156
    %v1175 = vsub.f32 %v1069, %v1159
    %v1176 = vsub.f32 %v1088, %v1162
    %v1177 = vsub.f32 %v1107, %v1165
    %v1178 = vsub.f32 %v1126, %v1168
    %v1179 = vsub.f32 %v1145, %v1171
    %v1180 = vmul.f32 %v1172, 1.442695
    %v1181 = vpow.pop %v1180
    %v1182 = vmul.f32 %v1173, 1.442695
    %v1183 = vpow.pop %v1182
    %v1184 = vmul.f32 %v1174, 1.442695
    %v1185 = vpow.pop %v1184
    %v1186 = vmul.f32 %v1175, 1.442695
    %v1187 = vpow.pop %v1186
    %v1188 = vmul.f32 %v1176, 1.442695
    %v1189 = vpow.pop %v1188
    %v1190 = vmul.f32 %v1177, 1.442695
    %v1191 = vpow.pop %v1190
    %v1192 = vmul.f32 %v1178, 1.442695
    %v1193 = vpow.pop %v1192
    %v1194 = vmul.f32 %v1179, 1.442695
    %v1195 = vpow.pop %v1194
    %v1196 = vsel %vm995, %v1181, 0.0
    %1197 = vadd.xlane.f32.xlu0 %v1196
    %v1198 = vpop.xlane.xlu0 %1197
    %v1199 = vsel %vm995, %v1183, 0.0
    %1200 = vadd.xlane.f32.xlu0 %v1199
    %v1201 = vpop.xlane.xlu0 %1200
    %v1202 = vsel %vm995, %v1185, 0.0
    %1203 = vadd.xlane.f32.xlu0 %v1202
    %v1204 = vpop.xlane.xlu0 %1203
    %v1205 = vsel %vm995, %v1187, 0.0
    %1206 = vadd.xlane.f32.xlu0 %v1205
    %v1207 = vpop.xlane.xlu0 %1206
    %v1208 = vsel %vm995, %v1189, 0.0
    %1209 = vadd.xlane.f32.xlu0 %v1208
    %v1210 = vpop.xlane.xlu0 %1209
    %v1211 = vsel %vm995, %v1191, 0.0
    %1212 = vadd.xlane.f32.xlu0 %v1211
    %v1213 = vpop.xlane.xlu0 %1212
    %v1214 = vsel %vm995, %v1193, 0.0
    %1215 = vadd.xlane.f32.xlu0 %v1214
    %v1216 = vpop.xlane.xlu0 %1215
    %v1217 = vsel %vm995, %v1195, 0.0
    %1218 = vadd.xlane.f32.xlu0 %v1217
    %v1219 = vpop.xlane.xlu0 %1218
    %v1220 = vpack.c.bf16 %v1181, %v1181
    %v1221 = vpack.c.bf16 %v1183, %v1183
    %v1222 = vpack.c.bf16 %v1185, %v1185
    %v1223 = vpack.c.bf16 %v1187, %v1187
    %v1224 = vpack.c.bf16 %v1189, %v1189
    %v1225 = vpack.c.bf16 %v1191, %v1191
    %v1226 = vpack.c.bf16 %v1193, %v1193
    %v1227 = vpack.c.bf16 %v1195, %v1195
    %v1229 = vsel %vm995, %v1220, 0
    %vm1231 = vcmask 1043456
    %v1233 = vsel %vm1231, %v987, 0
    %1235 = vmatpush.bf16.msra.mxu0 0
    %1236 = vmatpush.bf16.msra.mxu0 0
    %1237 = vmatpush.bf16.msra.mxu0 0
    %1238 = vmatpush.bf16.msra.mxu0 0
    %1239 = vmatpush.bf16.msra.mxu0 0
    %1240 = vmatpush.bf16.msra.mxu0 0
    %1241 = vmatpush.bf16.msra.mxu0 0
    %1242 = vmatpush.bf16.msra.mxu0 %v1233
    %1243 = vmatmul.bf16.gmra.mxu0 %v1229
    %v1244 = vpop.f32.mrf.mxu0
    %v1245 = vadd.f32 0.0, %v1244
    %v1246 = vpop.f32.mrf.mxu0
    %1247 = vdwg.mxu0
    %v1249 = vsel %vm995, %v1221, 0
    %v1252 = vsel %vm1231, %v988, 0
    %1254 = vmatpush.bf16.msra.mxu0 0
    %1255 = vmatpush.bf16.msra.mxu0 0
    %1256 = vmatpush.bf16.msra.mxu0 0
    %1257 = vmatpush.bf16.msra.mxu0 0
    %1258 = vmatpush.bf16.msra.mxu0 0
    %1259 = vmatpush.bf16.msra.mxu0 0
    %1260 = vmatpush.bf16.msra.mxu0 0
    %1261 = vmatpush.bf16.msra.mxu0 %v1252
    %1262 = vmatmul.bf16.gmra.mxu0 %v1249
    %v1263 = vpop.f32.mrf.mxu0
    %v1264 = vadd.f32 0.0, %v1263
    %v1265 = vpop.f32.mrf.mxu0
    %1266 = vdwg.mxu0
    %v1268 = vsel %vm995, %v1222, 0
    %v1271 = vsel %vm1231, %v989, 0
    %1273 = vmatpush.bf16.msra.mxu0 0
    %1274 = vmatpush.bf16.msra.mxu0 0
    %1275 = vmatpush.bf16.msra.mxu0 0
    %1276 = vmatpush.bf16.msra.mxu0 0
    %1277 = vmatpush.bf16.msra.mxu0 0
    %1278 = vmatpush.bf16.msra.mxu0 0
    %1279 = vmatpush.bf16.msra.mxu0 0
    %1280 = vmatpush.bf16.msra.mxu0 %v1271
    %1281 = vmatmul.bf16.gmra.mxu0 %v1268
    %v1282 = vpop.f32.mrf.mxu0
    %v1283 = vadd.f32 0.0, %v1282
    %v1284 = vpop.f32.mrf.mxu0
    %1285 = vdwg.mxu0
    %v1287 = vsel %vm995, %v1223, 0
    %v1290 = vsel %vm1231, %v990, 0
    %1292 = vmatpush.bf16.msra.mxu0 0
    %1293 = vmatpush.bf16.msra.mxu0 0
    %1294 = vmatpush.bf16.msra.mxu0 0
    %1295 = vmatpush.bf16.msra.mxu0 0
    %1296 = vmatpush.bf16.msra.mxu0 0
    %1297 = vmatpush.bf16.msra.mxu0 0
    %1298 = vmatpush.bf16.msra.mxu0 0
    %1299 = vmatpush.bf16.msra.mxu0 %v1290
    %1300 = vmatmul.bf16.gmra.mxu0 %v1287
    %v1301 = vpop.f32.mrf.mxu0
    %v1302 = vadd.f32 0.0, %v1301
    %v1303 = vpop.f32.mrf.mxu0
    %1304 = vdwg.mxu0
    %v1306 = vsel %vm995, %v1224, 0
    %v1309 = vsel %vm1231, %v991, 0
    %1311 = vmatpush.bf16.msra.mxu0 0
    %1312 = vmatpush.bf16.msra.mxu0 0
    %1313 = vmatpush.bf16.msra.mxu0 0
    %1314 = vmatpush.bf16.msra.mxu0 0
    %1315 = vmatpush.bf16.msra.mxu0 0
    %1316 = vmatpush.bf16.msra.mxu0 0
    %1317 = vmatpush.bf16.msra.mxu0 0
    %1318 = vmatpush.bf16.msra.mxu0 %v1309
    %1319 = vmatmul.bf16.gmra.mxu0 %v1306
    %v1320 = vpop.f32.mrf.mxu0
    %v1321 = vadd.f32 0.0, %v1320
    %v1322 = vpop.f32.mrf.mxu0
    %1323 = vdwg.mxu0
    %v1325 = vsel %vm995, %v1225, 0
    %v1328 = vsel %vm1231, %v992, 0
    %1330 = vmatpush.bf16.msra.mxu0 0
    %1331 = vmatpush.bf16.msra.mxu0 0
    %1332 = vmatpush.bf16.msra.mxu0 0
    %1333 = vmatpush.bf16.msra.mxu0 0
    %1334 = vmatpush.bf16.msra.mxu0 0
    %1335 = vmatpush.bf16.msra.mxu0 0
    %1336 = vmatpush.bf16.msra.mxu0 0
    %1337 = vmatpush.bf16.msra.mxu0 %v1328
    %1338 = vmatmul.bf16.gmra.mxu0 %v1325
    %v1339 = vpop.f32.mrf.mxu0
    %v1340 = vadd.f32 0.0, %v1339
    %v1341 = vpop.f32.mrf.mxu0
    %1342 = vdwg.mxu0
    %v1344 = vsel %vm995, %v1226, 0
    %v1347 = vsel %vm1231, %v993, 0
    %1349 = vmatpush.bf16.msra.mxu0 0
    %1350 = vmatpush.bf16.msra.mxu0 0
    %1351 = vmatpush.bf16.msra.mxu0 0
    %1352 = vmatpush.bf16.msra.mxu0 0
    %1353 = vmatpush.bf16.msra.mxu0 0
    %1354 = vmatpush.bf16.msra.mxu0 0
    %1355 = vmatpush.bf16.msra.mxu0 0
    %1356 = vmatpush.bf16.msra.mxu0 %v1347
    %1357 = vmatmul.bf16.gmra.mxu0 %v1344
    %v1358 = vpop.f32.mrf.mxu0
    %v1359 = vadd.f32 0.0, %v1358
    %v1360 = vpop.f32.mrf.mxu0
    %1361 = vdwg.mxu0
    %v1363 = vsel %vm995, %v1227, 0
    %v1366 = vsel %vm1231, %v994, 0
    %1368 = vmatpush.bf16.msra.mxu0 0
    %1369 = vmatpush.bf16.msra.mxu0 0
    %1370 = vmatpush.bf16.msra.mxu0 0
    %1371 = vmatpush.bf16.msra.mxu0 0
    %1372 = vmatpush.bf16.msra.mxu0 0
    %1373 = vmatpush.bf16.msra.mxu0 0
    %1374 = vmatpush.bf16.msra.mxu0 0
    %1375 = vmatpush.bf16.msra.mxu0 %v1366
    %1376 = vmatmul.bf16.gmra.mxu0 %v1363
    %v1377 = vpop.f32.mrf.mxu0
    %v1378 = vadd.f32 0.0, %v1377
    %v1379 = vpop.f32.mrf.mxu0
    %1380 = vdwg.mxu0
    %v1381 = vrcp.pop %v1198
    %v1382 = vrcp.pop %v1201
    %v1383 = vrcp.pop %v1204
    %v1384 = vrcp.pop %v1207
    %v1385 = vrcp.pop %v1210
    %v1386 = vrcp.pop %v1213
    %v1387 = vrcp.pop %v1216
    %v1388 = vrcp.pop %v1219
    %v1389 = vmul.f32 %v1245, %v1381
    %v1390 = vmul.f32 %v1264, %v1382
    %v1391 = vmul.f32 %v1283, %v1383
    %v1392 = vmul.f32 %v1302, %v1384
    %v1393 = vmul.f32 %v1321, %v1385
    %v1394 = vmul.f32 %v1340, %v1386
    %v1395 = vmul.f32 %v1359, %v1387
    %v1396 = vmul.f32 %v1378, %v1388
    %v1397 = vrot.slane %v1391, 4
    %v1398 = vsel %vm271, %v1397, %v1389
    %v1399 = vrot.slane %v1389, 4
    %v1400 = vsel %vm271, %v1391, %v1399
    %v1402 = vunpack.c.l.s4 1983009808
    %v1403 = vunpack.c.0.s8 %v1402
    %v1404 = vperm.slane %v1398, %v1403
    %v1406 = vunpack.c.l.s4 1983009808
    %v1407 = vunpack.c.0.s8 %v1406
    %v1408 = vperm.slane %v1400, %v1407
    %v1409 = vrot.slane %v1392, 4
    %v1410 = vsel %vm271, %v1409, %v1390
    %v1411 = vrot.slane %v1390, 4
    %v1412 = vsel %vm271, %v1392, %v1411
    %v1414 = vunpack.c.l.s4 1983009808
    %v1415 = vunpack.c.0.s8 %v1414
    %v1416 = vperm.slane %v1410, %v1415
    %v1418 = vunpack.c.l.s4 1983009808
    %v1419 = vunpack.c.0.s8 %v1418
    %v1420 = vperm.slane %v1412, %v1419
    %v1421 = vrot.slane %v1416, 4
    %v1422 = vsel %vm271, %v1421, %v1404
    %v1423 = vrot.slane %v1404, 4
    %v1424 = vsel %vm271, %v1416, %v1423
    %v1426 = vunpack.c.l.s4 1934713408
    %v1427 = vunpack.c.0.s8 %v1426
    %v1428 = vperm.slane %v1422, %v1427
    %v1430 = vunpack.c.l.s4 1934713408
    %v1431 = vunpack.c.0.s8 %v1430
    %v1432 = vperm.slane %v1424, %v1431
    %v1433 = vrot.slane %v1420, 4
    %v1434 = vsel %vm271, %v1433, %v1408
    %v1435 = vrot.slane %v1408, 4
    %v1436 = vsel %vm271, %v1420, %v1435
    %v1438 = vunpack.c.l.s4 1934713408
    %v1439 = vunpack.c.0.s8 %v1438
    %v1440 = vperm.slane %v1434, %v1439
    %v1442 = vunpack.c.l.s4 1934713408
    %v1443 = vunpack.c.0.s8 %v1442
    %v1444 = vperm.slane %v1436, %v1443
    %v1445 = vrot.slane %v1428, 4
    %v1446 = vsel %vm271, 0.0, %v1445
    %v1447 = vrot.slane %v1432, 4
    %v1448 = vsel %vm271, 0.0, %v1447
    %v1449 = vrot.slane %v1440, 4
    %v1450 = vsel %vm271, 0.0, %v1449
    %v1451 = vrot.slane %v1444, 4
    %v1452 = vsel %vm271, 0.0, %v1451
    %v1453 = vrot.slane %v1395, 4
    %v1454 = vsel %vm271, %v1453, %v1393
    %v1455 = vrot.slane %v1393, 4
    %v1456 = vsel %vm271, %v1395, %v1455
    %v1458 = vunpack.c.l.s4 1983009808
    %v1459 = vunpack.c.0.s8 %v1458
    %v1460 = vperm.slane %v1454, %v1459
    %v1462 = vunpack.c.l.s4 1983009808
    %v1463 = vunpack.c.0.s8 %v1462
    %v1464 = vperm.slane %v1456, %v1463
    %v1465 = vrot.slane %v1396, 4
    %v1466 = vsel %vm271, %v1465, %v1394
    %v1467 = vrot.slane %v1394, 4
    %v1468 = vsel %vm271, %v1396, %v1467
    %v1470 = vunpack.c.l.s4 1983009808
    %v1471 = vunpack.c.0.s8 %v1470
    %v1472 = vperm.slane %v1466, %v1471
    %v1474 = vunpack.c.l.s4 1983009808
    %v1475 = vunpack.c.0.s8 %v1474
    %v1476 = vperm.slane %v1468, %v1475
    %v1477 = vrot.slane %v1472, 4
    %v1478 = vsel %vm271, %v1477, %v1460
    %v1479 = vrot.slane %v1460, 4
    %v1480 = vsel %vm271, %v1472, %v1479
    %v1482 = vunpack.c.l.s4 1934713408
    %v1483 = vunpack.c.0.s8 %v1482
    %v1484 = vperm.slane %v1478, %v1483
    %v1486 = vunpack.c.l.s4 1934713408
    %v1487 = vunpack.c.0.s8 %v1486
    %v1488 = vperm.slane %v1480, %v1487
    %v1489 = vrot.slane %v1476, 4
    %v1490 = vsel %vm271, %v1489, %v1464
    %v1491 = vrot.slane %v1464, 4
    %v1492 = vsel %vm271, %v1476, %v1491
    %v1494 = vunpack.c.l.s4 1934713408
    %v1495 = vunpack.c.0.s8 %v1494
    %v1496 = vperm.slane %v1490, %v1495
    %v1498 = vunpack.c.l.s4 1934713408
    %v1499 = vunpack.c.0.s8 %v1498
    %v1500 = vperm.slane %v1492, %v1499
    %v1501 = vrot.slane %v1484, 4
    %v1502 = vsel %vm271, 0.0, %v1501
    %v1503 = vrot.slane %v1488, 4
    %v1504 = vsel %vm271, 0.0, %v1503
    %v1505 = vrot.slane %v1496, 4
    %v1506 = vsel %vm271, 0.0, %v1505
    %v1507 = vrot.slane %v1500, 4
    %v1508 = vsel %vm271, 0.0, %v1507
    %v1509 = vsel %vm271, %v1447, %v1428
    %v1511 = vunpack.c.l.s4 1983009808
    %v1512 = vunpack.c.0.s8 %v1511
    %v1513 = vperm.slane %v1509, %v1512
    %v1514 = vrot.slane %v1448, 4
    %v1515 = vsel %vm271, %v1514, %v1446
    %v1517 = vunpack.c.l.s4 1983009808
    %v1518 = vunpack.c.0.s8 %v1517
    %v1519 = vperm.slane %v1515, %v1518
    %v1520 = vsel %vm271, %v1451, %v1440
    %v1522 = vunpack.c.l.s4 1983009808
    %v1523 = vunpack.c.0.s8 %v1522
    %v1524 = vperm.slane %v1520, %v1523
    %v1525 = vrot.slane %v1452, 4
    %v1526 = vsel %vm271, %v1525, %v1450
    %v1528 = vunpack.c.l.s4 1983009808
    %v1529 = vunpack.c.0.s8 %v1528
    %v1530 = vperm.slane %v1526, %v1529
    %v1531 = vrot.slane %v1519, 4
    %v1532 = vsel %vm271, %v1531, %v1513
    %v1533 = vrot.slane %v1513, 4
    %v1534 = vsel %vm271, %v1519, %v1533
    %v1536 = vunpack.c.l.s4 1934713408
    %v1537 = vunpack.c.0.s8 %v1536
    %v1538 = vperm.slane %v1532, %v1537
    %v1540 = vunpack.c.l.s4 1934713408
    %v1541 = vunpack.c.0.s8 %v1540
    %v1542 = vperm.slane %v1534, %v1541
    %v1543 = vrot.slane %v1530, 4
    %v1544 = vsel %vm271, %v1543, %v1524
    %v1545 = vrot.slane %v1524, 4
    %v1546 = vsel %vm271, %v1530, %v1545
    %v1548 = vunpack.c.l.s4 1934713408
    %v1549 = vunpack.c.0.s8 %v1548
    %v1550 = vperm.slane %v1544, %v1549
    %v1552 = vunpack.c.l.s4 1934713408
    %v1553 = vunpack.c.0.s8 %v1552
    %v1554 = vperm.slane %v1546, %v1553
    %v1555 = vrot.slane %v1550, 4
    %v1556 = vsel %vm271, %v1555, %v1538
    %v1557 = vrot.slane %v1538, 4
    %v1558 = vsel %vm271, %v1550, %v1557
    %v1559 = vrot.slane %v1554, 4
    %v1560 = vsel %vm271, %v1559, %v1542
    %v1561 = vrot.slane %v1542, 4
    %v1562 = vsel %vm271, %v1554, %v1561
    %v1563 = vsel %vm271, %v1503, %v1484
    %v1565 = vunpack.c.l.s4 1983009808
    %v1566 = vunpack.c.0.s8 %v1565
    %v1567 = vperm.slane %v1563, %v1566
    %v1568 = vrot.slane %v1504, 4
    %v1569 = vsel %vm271, %v1568, %v1502
    %v1571 = vunpack.c.l.s4 1983009808
    %v1572 = vunpack.c.0.s8 %v1571
    %v1573 = vperm.slane %v1569, %v1572
    %v1574 = vsel %vm271, %v1507, %v1496
    %v1576 = vunpack.c.l.s4 1983009808
    %v1577 = vunpack.c.0.s8 %v1576
    %v1578 = vperm.slane %v1574, %v1577
    %v1579 = vrot.slane %v1508, 4
    %v1580 = vsel %vm271, %v1579, %v1506
    %v1582 = vunpack.c.l.s4 1983009808
    %v1583 = vunpack.c.0.s8 %v1582
    %v1584 = vperm.slane %v1580, %v1583
    %v1585 = vrot.slane %v1573, 4
    %v1586 = vsel %vm271, %v1585, %v1567
    %v1587 = vrot.slane %v1567, 4
    %v1588 = vsel %vm271, %v1573, %v1587
    %v1590 = vunpack.c.l.s4 1934713408
    %v1591 = vunpack.c.0.s8 %v1590
    %v1592 = vperm.slane %v1586, %v1591
    %v1594 = vunpack.c.l.s4 1934713408
    %v1595 = vunpack.c.0.s8 %v1594
    %v1596 = vperm.slane %v1588, %v1595
    %v1597 = vrot.slane %v1584, 4
    %v1598 = vsel %vm271, %v1597, %v1578
    %v1599 = vrot.slane %v1578, 4
    %v1600 = vsel %vm271, %v1584, %v1599
    %v1602 = vunpack.c.l.s4 1934713408
    %v1603 = vunpack.c.0.s8 %v1602
    %v1604 = vperm.slane %v1598, %v1603
    %v1606 = vunpack.c.l.s4 1934713408
    %v1607 = vunpack.c.0.s8 %v1606
    %v1608 = vperm.slane %v1600, %v1607
    %v1609 = vrot.slane %v1604, 4
    %v1610 = vsel %vm271, %v1609, %v1592
    %v1611 = vrot.slane %v1592, 4
    %v1612 = vsel %vm271, %v1604, %v1611
    %v1613 = vrot.slane %v1608, 4
    %v1614 = vsel %vm271, %v1613, %v1596
    %v1615 = vrot.slane %v1596, 4
    %v1616 = vsel %vm271, %v1608, %v1615
    %1619 = vrot.lane.b32.xlu0 %v1558, 8
    %v1620 = vpop.permute.xlu0 %1619
    %1621 = vrot.lane.b32.xlu0 %v1612, 8
    %v1622 = vpop.permute.xlu0 %1621
    %1627 = vrot.lane.b32.xlu0 %v1560, 16
    %v1628 = vpop.permute.xlu0 %1627
    %1629 = vrot.lane.b32.xlu0 %v1614, 16
    %v1630 = vpop.permute.xlu0 %1629
    %1635 = vrot.lane.b32.xlu0 %v1562, 24
    %v1636 = vpop.permute.xlu0 %1635
    %1637 = vrot.lane.b32.xlu0 %v1616, 24
    %v1638 = vpop.permute.xlu0 %1637
    %v1641 = vsel %vm995, %v1556, %v1620
    %v1642 = vsel %vm995, %v1610, %v1622
    %vm1643 = vcmask 130048
    %v1644 = vsel %vm1643, %v1641, %v1628
    %v1645 = vsel %vm1643, %v1642, %v1630
    %vm1646 = vcmask 195584
    %v1647 = vsel %vm1646, %v1644, %v1636
    %v1648 = vsel %vm1646, %v1645, %v1638
    %v1649 = vpack.c.bf16 %v1648, %v1647
    %v1651 = vperm.slane %v223, 0
    %v1657 = vunpack.c.l.b16 %v219
    %v1658 = vunpack.c.l.b16 %v220
    %v1659 = vunpack.c.l.b16 %v221
    %v1660 = vunpack.c.l.b16 %v222
    %v1661 = vpack.c.b16 %v1658, %v1657
    %v1662 = vpack.c.b16 %v1660, %v1659
    %v1666 = vsel %vm129, %v1649, 0
    %1668 = vmatpush.bf16.msra.mxu0 0
    %1669 = vmatpush.bf16.msra.mxu0 0
    %1670 = vmatpush.bf16.msra.mxu0 0
    %1671 = vmatpush.bf16.msra.mxu0 0
    %1672 = vmatpush.bf16.msra.mxu0 0
    %1673 = vmatpush.bf16.msra.mxu0 0
    %1674 = vmatpush.bf16.msra.mxu0 %v1662
    %1675 = vmatpush.bf16.msra.mxu0 %v1661
    %1676 = vmatmul.bf16.gmra.mxu0 %v1666
    %v1677 = vpop.f32.mrf.mxu0
    %v1678 = vadd.f32 %v1651, %v1677
    %v1679 = vpop.f32.mrf.mxu0
    %v1680 = vadd.f32 %v1651, %v1679
    %1681 = vdwg.mxu0
    %v1682 = vadd.f32 %v1678, %v106
    %v1683 = vadd.f32 %v1680, %v107
    %v1684 = vsel %vm129, %v1682, 0.0
    %1685 = vadd.xlane.f32.xlu0 %v1684
    %v1686 = vpop.xlane.xlu0 %1685
    %v1687 = vsel %vm129, %v1683, 0.0
    %1688 = vadd.xlane.f32.xlu0 %v1687
    %v1689 = vpop.xlane.xlu0 %1688
    %v1690 = vrcp.pop 32.0
    %v1691 = vmul.f32 32.0, %v1690
    %v1692 = vsub.f32 1.0, %v1691
    %v1693 = vmul.f32 %v1690, %v1692
    %v1694 = vadd.f32 %v1690, %v1693
    %vm1695 = vweird.f32 %v1690
    %v1696 = vsel %vm1695, %v1690, %v1694
    %v1697 = vmul.f32 %v1686, %v1696
    %v1698 = vmul.f32 %v1689, %v1696
    %v1699 = vmul.f32 %v1682, %v1682
    %v1700 = vmul.f32 %v1683, %v1683
    %v1701 = vsel %vm129, %v1699, 0.0
    %1702 = vadd.xlane.f32.xlu0 %v1701
    %v1703 = vpop.xlane.xlu0 %1702
    %v1704 = vsel %vm129, %v1700, 0.0
    %1705 = vadd.xlane.f32.xlu0 %v1704
    %v1706 = vpop.xlane.xlu0 %1705
    %v1707 = vmul.f32 %v1703, %v1696
    %v1708 = vmul.f32 %v1706, %v1696
    %v1709 = vmul.f32 %v1697, %v1697
    %v1710 = vmul.f32 %v1698, %v1698
    %v1711 = vsub.f32 %v1707, %v1709
    %v1712 = vsub.f32 %v1708, %v1710
    %v1713 = vsub.f32 %v1682, %v1697
    %v1714 = vsub.f32 %v1683, %v1698
    %v1715 = vadd.f32 %v1711, 1e-05
    %v1716 = vadd.f32 %v1712, 1e-05
    %v1717 = vrsqrt.pop %v1715
    %v1718 = vmul.f32 %v1717, %v1715
    %v1719 = vmul.f32 %v1718, %v1717
    %v1720 = vmul.f32 0.5, %v1719
    %v1721 = vsub.f32 1.5, %v1720
    %v1722 = vmul.f32 %v1717, %v1721
    %vm1723 = vweird.f32 %v1715
    %vm1724 = vweird.f32 %v1717
    %vm1725 = vmor %vm1723, %vm1724
    %v1726 = vsel %vm1725, %v1717, %v1722
    %v1727 = vrsqrt.pop %v1716
    %v1728 = vmul.f32 %v1727, %v1716
    %v1729 = vmul.f32 %v1728, %v1727
    %v1730 = vmul.f32 0.5, %v1729
    %v1731 = vsub.f32 1.5, %v1730
    %v1732 = vmul.f32 %v1727, %v1731
    %vm1733 = vweird.f32 %v1716
    %vm1734 = vweird.f32 %v1727
    %vm1735 = vmor %vm1733, %vm1734
    %v1736 = vsel %vm1735, %v1727, %v1732
    %v1737 = vmul.f32 %v1713, %v1726
    %v1738 = vmul.f32 %v1714, %v1736
    %v1740 = vperm.slane %v224, 0
    %v1742 = vmul.f32 %v1737, %v1740
    %v1743 = vmul.f32 %v1738, %v1740
    %v1745 = vperm.slane %v225, 0
    %v1747 = vadd.f32 %v1742, %v1745
    %v1748 = vadd.f32 %v1743, %v1745
    %v1749 = vpack.c.bf16 %v1748, %v1747
    %v1751 = vperm.slane %v230, 0
    %v1757 = vunpack.c.l.b16 %v226
    %v1758 = vunpack.c.l.b16 %v227
    %v1759 = vunpack.c.l.b16 %v228
    %v1760 = vunpack.c.l.b16 %v229
    %v1761 = vpack.c.b16 %v1758, %v1757
    %v1762 = vpack.c.b16 %v1760, %v1759
    %v1766 = vsel %vm129, %v1749, 0
    %1768 = vmatpush.bf16.msra.mxu0 0
    %1769 = vmatpush.bf16.msra.mxu0 0
    %1770 = vmatpush.bf16.msra.mxu0 0
    %1771 = vmatpush.bf16.msra.mxu0 0
    %1772 = vmatpush.bf16.msra.mxu0 0
    %1773 = vmatpush.bf16.msra.mxu0 0
    %1774 = vmatpush.bf16.msra.mxu0 %v1762
    %1775 = vmatpush.bf16.msra.mxu0 %v1761
    %1776 = vmatmul.bf16.gmra.mxu0 %v1766
    %v1777 = vpop.f32.mrf.mxu0
    %v1778 = vadd.f32 %v1751, %v1777
    %v1779 = vpop.f32.mrf.mxu0
    %v1780 = vadd.f32 %v1751, %v1779
    %1781 = vdwg.mxu0
    %v1782 = vmax.f32 %v1778, 0.0
    %v1783 = vmax.f32 %v1780, 0.0
    %v1784 = vpack.c.bf16 %v1783, %v1782
    %v1786 = vperm.slane %v247, 0
    %v1804 = vunpack.c.l.b16 %v231
    %v1805 = vunpack.c.l.b16 %v232
    %v1806 = vunpack.c.l.b16 %v233
    %v1807 = vunpack.c.l.b16 %v234
    %v1808 = vunpack.c.l.b16 %v235
    %v1809 = vunpack.c.l.b16 %v236
    %v1810 = vunpack.c.l.b16 %v237
    %v1811 = vunpack.c.l.b16 %v238
    %v1812 = vunpack.c.l.b16 %v239
    %v1813 = vunpack.c.l.b16 %v240
    %v1814 = vunpack.c.l.b16 %v241
    %v1815 = vunpack.c.l.b16 %v242
    %v1816 = vunpack.c.l.b16 %v243
    %v1817 = vunpack.c.l.b16 %v244
    %v1818 = vunpack.c.l.b16 %v245
    %v1819 = vunpack.c.l.b16 %v246
    %v1820 = vpack.c.b16 %v1805, %v1804
    %v1821 = vpack.c.b16 %v1807, %v1806
    %v1822 = vpack.c.b16 %v1809, %v1808
    %v1823 = vpack.c.b16 %v1811, %v1810
    %v1824 = vpack.c.b16 %v1813, %v1812
    %v1825 = vpack.c.b16 %v1815, %v1814
    %v1826 = vpack.c.b16 %v1817, %v1816
    %v1827 = vpack.c.b16 %v1819, %v1818
    %1836 = vmatpush.bf16.msra.mxu0 %v1827
    %1837 = vmatpush.bf16.msra.mxu0 %v1826
    %1838 = vmatpush.bf16.msra.mxu0 %v1825
    %1839 = vmatpush.bf16.msra.mxu0 %v1824
    %1840 = vmatpush.bf16.msra.mxu0 %v1823
    %1841 = vmatpush.bf16.msra.mxu0 %v1822
    %1842 = vmatpush.bf16.msra.mxu0 %v1821
    %1843 = vmatpush.bf16.msra.mxu0 %v1820
    %1844 = vmatmul.bf16.gmra.mxu0 %v1784
    %v1845 = vpop.f32.mrf.mxu0
    %v1846 = vadd.f32 %v1786, %v1845
    %v1847 = vpop.f32.mrf.mxu0
    %v1848 = vadd.f32 %v1786, %v1847
    %1849 = vdwg.mxu0
    %v1850 = vadd.f32 %v1846, %v1747
    %v1851 = vadd.f32 %v1848, %v1748
    %v1852 = vsel %vm129, %v1850, 0.0
    %1853 = vadd.xlane.f32.xlu0 %v1852
    %v1854 = vpop.xlane.xlu0 %1853
    %v1855 = vsel %vm129, %v1851, 0.0
    %1856 = vadd.xlane.f32.xlu0 %v1855
    %v1857 = vpop.xlane.xlu0 %1856
    %v1858 = vmul.f32 %v1854, %v1696
    %v1859 = vmul.f32 %v1857, %v1696
    %v1860 = vmul.f32 %v1850, %v1850
    %v1861 = vmul.f32 %v1851, %v1851
    %v1862 = vsel %vm129, %v1860, 0.0
    %1863 = vadd.xlane.f32.xlu0 %v1862
    %v1864 = vpop.xlane.xlu0 %1863
    %v1865 = vsel %vm129, %v1861, 0.0
    %1866 = vadd.xlane.f32.xlu0 %v1865
    %v1867 = vpop.xlane.xlu0 %1866
    %v1868 = vmul.f32 %v1864, %v1696
    %v1869 = vmul.f32 %v1867, %v1696
    %v1870 = vmul.f32 %v1858, %v1858
    %v1871 = vmul.f32 %v1859, %v1859
    %v1872 = vsub.f32 %v1868, %v1870
    %v1873 = vsub.f32 %v1869, %v1871
    %v1874 = vsub.f32 %v1850, %v1858
    %v1875 = vsub.f32 %v1851, %v1859
    %v1876 = vadd.f32 %v1872, 1e-05
    %v1877 = vadd.f32 %v1873, 1e-05
    %v1878 = vrsqrt.pop %v1876
    %v1879 = vmul.f32 %v1878, %v1876
    %v1880 = vmul.f32 %v1879, %v1878
    %v1881 = vmul.f32 0.5, %v1880
    %v1882 = vsub.f32 1.5, %v1881
    %v1883 = vmul.f32 %v1878, %v1882
    %vm1884 = vweird.f32 %v1876
    %vm1885 = vweird.f32 %v1878
    %vm1886 = vmor %vm1884, %vm1885
    %v1887 = vsel %vm1886, %v1878, %v1883
    %v1888 = vrsqrt.pop %v1877
    %v1889 = vmul.f32 %v1888, %v1877
    %v1890 = vmul.f32 %v1889, %v1888
    %v1891 = vmul.f32 0.5, %v1890
    %v1892 = vsub.f32 1.5, %v1891
    %v1893 = vmul.f32 %v1888, %v1892
    %vm1894 = vweird.f32 %v1877
    %vm1895 = vweird.f32 %v1888
    %vm1896 = vmor %vm1894, %vm1895
    %v1897 = vsel %vm1896, %v1888, %v1893
    %v1898 = vmul.f32 %v1874, %v1887
    %v1899 = vmul.f32 %v1875, %v1897
    %v1901 = vperm.slane %v248, 0
    %v1903 = vmul.f32 %v1898, %v1901
    %v1904 = vmul.f32 %v1899, %v1901
    %v1906 = vperm.slane %v249, 0
    %v1908 = vadd.f32 %v1903, %v1906
    %v1909 = vadd.f32 %v1904, %v1906
    %1910 = vst.msk [vmem:[#allocation8] sm:$0xff] %vm129, %v1908
    %1911 = vst.msk [vmem:[#allocation8 + $0x8] sm:$0xff] %vm129, %v1909
    // Predicated region
    $region78: #{tpu_custom_call.1} parent=1 // pred_check
      _
    $region79: #{tpu_custom_call.1} parent=1 // pred_check_branch
      %1913 = sbr.rel (0) target = $region81
    $region80: #{tpu_custom_call.1} parent=1 // pred_region
      %1915 = vsyncadd [#allocation4], 0
      %s1916 = sshll.u32 [#allocation8], 4
      %s1917 = int_to_ptr.vmem [resolvable:$true] %s1916
      %s1918 = sshll.u32 %s16, 4
      %s1919 = int_to_ptr.hbm [resolvable:$true] %s1918
      %1924 = dma.vmem_to_hbm [thread:$0]  %s1917, 256, %s1919, [#allocation4], 128, 128, 8
    $region81: #{tpu_custom_call.1} parent=1 // pred_fallthru
      _
    // Predicated region
    $region82: #{tpu_custom_call.1} parent=1 // pred_check
      _
    $region83: #{tpu_custom_call.1} parent=1 // pred_check_branch
      %1926 = sbr.rel (0) target = $region85
    $region84: #{tpu_custom_call.1} parent=1 // pred_region
      %1928 = dma.done [#allocation4], 256
    $region85: #{tpu_custom_call.1} parent=1 // pred_fallthru
      _
    %1929 = vsyncpa [#allocation3], 1
    %1930 = vsyncpa [#allocation6], 1
    %1931 = vsyncpa [#allocation4], 1

</llo_original>
